<compile_context>
chip_gen: v7x
topology: tpu7x:2x2x1
jax: 0.10.0
libtpu: 0.0.40
codegen_flags: <defaults>
</compile_context>

<pallas_src>
import numpy as np
import jax
import jax.numpy as jnp
from jax.experimental import pallas as pl
from jax.experimental.pallas import tpu as pltpu


def _round_up(x, m):
    return (x + m - 1) // m * m


def _device_kind():
    try:
        return jax.devices()[0].device_kind.lower()
    except Exception:
        return ""


def default_fold_factor():
    """Rows folded into the lane axis.  v5e MXU is 128x128 -> K = F*16 = 128 (F=8);
    v6e / v7x MXUs are 256-wide -> F=16 (also makes the output block 128 lanes)."""
    return 8 if "v5" in _device_kind() else 16


def _batch_dimension_semantics():
    # v7x has 2 TensorCores per chip: explicitly request core-parallel sharding of
    # the batch grid there.  Plain "parallel" on the single-TC v5e / v6e.
    if "v7" in _device_kind():
        return (pltpu.CORE_PARALLEL,)
    return ("parallel",)


def _td3_actor_kernel(x_ref, w1_ref, b1_ref, w2_ref, b2_ref, w3_ref, b3s_ref, o_ref):
    # MXU operands in bf16, accumulation + elementwise math in f32.
    x = x_ref[...].astype(jnp.bfloat16)

    h1 = jnp.dot(x, w1_ref[...], preferred_element_type=jnp.float32) + b1_ref[...]
    h1 = jnp.maximum(h1, 0.0)                                   # relu (f32)

    h2 = jnp.dot(h1.astype(jnp.bfloat16), w2_ref[...],
                 preferred_element_type=jnp.float32) + b2_ref[...]
    h2 = jnp.maximum(h2, 0.0)                                   # relu (f32)

    a = jnp.dot(h2.astype(jnp.bfloat16), w3_ref[...],
                preferred_element_type=jnp.float32) + b3s_ref[0:1, :]
    # row 0 of b3s = tiled b3, row 1 = tiled action_scaling.
    o_ref[...] = (b3s_ref[1:2, :] * jnp.tanh(a)).astype(o_ref.dtype)


def init_td3_actor_params(key, dim_state, dim_action, n_features, action_scaling):
    """Canonical f32 params mirroring the PyTorch __init__:
    h1/h2 weights & biases ~ U(-1/sqrt(fan_in), 1/sqrt(fan_in)),
    h3 weights ~ U(-3e-3, 3e-3), h3 bias ~ default U(-1/sqrt(fan_in), 1/sqrt(fan_in)).
    Weights are stored (in_features, out_features) so x @ W == PyTorch x @ W.T."""
    h1, h2 = n_features
    k = jax.random.split(key, 6)

    def uni(k_, shape, bound):
        return jax.random.uniform(k_, shape, jnp.float32, minval=-bound, maxval=bound)

    b_h1 = 1.0 / np.sqrt(dim_state)
    b_h2 = 1.0 / np.sqrt(h1)
    b_h3 = 1.0 / np.sqrt(h2)

    w1 = uni(k[0], (dim_state, h1), b_h1)
    b1 = uni(k[1], (1, h1), b_h1)
    w2 = uni(k[2], (h1, h2), b_h2)
    b2 = uni(k[3], (1, h2), b_h2)
    w3 = uni(k[4], (h2, dim_action), 0.003)
    b3 = uni(k[5], (1, dim_action), b_h3)
    scale = jnp.broadcast_to(
        jnp.asarray(action_scaling, jnp.float32).reshape(1, -1), (1, dim_action))
    return (w1, b1, w2, b2, w3, b3, scale)


def fold_td3_actor_params(params, fold=None):
    """One-time weight prep: block-diagonal (fold x) copies of each layer as bf16
    MXU-native matrices; biases tiled to the folded widths (scale packed with b3 so
    the kernel takes fewer constant refs).  Total < 1 MiB -> trivially VMEM-resident."""
    if fold is None:
        fold = default_fold_factor()
    fold = int(fold)
    w1, b1, w2, b2, w3, b3, scale = params
    eye = jnp.eye(fold, dtype=jnp.float32)
    w1_bd = jnp.kron(eye, w1).astype(jnp.bfloat16)      # (F*ds, F*h1)
    w2_bd = jnp.kron(eye, w2).astype(jnp.bfloat16)      # (F*h1, F*h2)
    w3_bd = jnp.kron(eye, w3).astype(jnp.bfloat16)      # (F*h2, F*A)
    b1_bd = jnp.tile(b1, (1, fold))                     # (1, F*h1) f32
    b2_bd = jnp.tile(b2, (1, fold))                     # (1, F*h2) f32
    b3s = jnp.concatenate([jnp.tile(b3, (1, fold)),     # (2, F*A) f32: row0=b3, row1=scale
                           jnp.tile(scale, (1, fold))], axis=0)
    return (fold, w1_bd, b1_bd, w2_bd, b2_bd, w3_bd, b3s)


def td3_actor_forward(state, folded_params, *, block_b=8192):
    """Fused TD3 actor forward.  `state`: (B, dim_state), f32 or bf16 (bf16 is fed
    to the MXU directly — do not astype in the caller).  Returns (B, dim_action) f32."""
    fold, w1, b1, w2, b2, w3, b3s = folded_params
    B, dim_state = state.shape
    Af = w3.shape[1]                      # fold * dim_action
    A = Af // fold

    # Only pad when B is not fold-aligned (<= fold-1 rows).  Tile-level raggedness
    # is handled by the grid instead of padding.
    B_pad = _round_up(B, fold)
    if B_pad != B:
        state = jnp.pad(state, ((0, B_pad - B), (0, 0)))
    Bf = B_pad // fold
    x = state.reshape(Bf, fold * dim_state)   # contiguous row merge -> free reshape

    # Folded batch tile: multiple of 8 sublanes.  Ragged last block: reads are
    # padded / writes masked by Pallas; rows are independent so this is safe
    # (do not add any cross-row reduction to the kernel).
    tbf = min(_round_up(max(block_b // fold, 1), 8), _round_up(Bf, 8))
    grid = (pl.cdiv(Bf, tbf),)

    def const_spec(arr):
        # Same block every grid step -> DMA'd once, stays VMEM-resident.
        return pl.BlockSpec(arr.shape, lambda i: (0, 0))

    out = pl.pallas_call(
        _td3_actor_kernel,
        out_shape=jax.ShapeDtypeStruct((Bf, Af), jnp.float32),
        grid=grid,
        in_specs=[
            pl.BlockSpec((tbf, fold * dim_state), lambda i: (i, 0)),   # folded states
            const_spec(w1), const_spec(b1),
            const_spec(w2), const_spec(b2),
            const_spec(w3), const_spec(b3s),
        ],
        out_specs=pl.BlockSpec((tbf, Af), lambda i: (i, 0)),
        compiler_params=pltpu.CompilerParams(
            dimension_semantics=_batch_dimension_semantics(),
            vmem_limit_bytes=32 * 1024 * 1024,
        ),
    )(x, w1, b1, w2, b2, w3, b3s)

    actions = out.reshape(B_pad, A)       # free split/merge reshape
    return actions[:B] if B_pad != B else actions


def _ref_forward(state, params):
    """Pure-JAX reference: f32 math with the kernel's bf16-rounded weights, so the
    only remaining differences are the in-kernel activation casts / accumulate order."""
    w1, b1, w2, b2, w3, b3, scale = params
    q = lambda w: w.astype(jnp.bfloat16).astype(jnp.float32)
    x = state.astype(jnp.float32)
    f1 = jnp.maximum(x @ q(w1) + b1, 0.0)
    f2 = jnp.maximum(f1 @ q(w2) + b2, 0.0)
    return scale * jnp.tanh(f2 @ q(w3) + b3)


if __name__ == "__main__":
    key = jax.random.PRNGKey(0)
    k_param, k_state, k_state2 = jax.random.split(key, 3)

    batch = 8
    dim_state = 16
    dim_action = 8
    n_features = (32, 32)
    action_scaling = 2.0 * np.ones((dim_action,), dtype=np.float32)

    params = init_td3_actor_params(k_param, dim_state, dim_action, n_features,
                                   action_scaling)
    fparams = fold_td3_actor_params(params)              # device-default fold factor

    # Small per-step style call (single tile; exercises the fold-remainder path).
    state = jax.random.normal(k_state, (batch, dim_state), jnp.float32)
    out = jax.block_until_ready(td3_actor_forward(state, fparams))
    ref = _ref_forward(state, params)
    np.testing.assert_allclose(np.asarray(out), np.asarray(ref), rtol=2e-2, atol=2e-2)

    # Multi-tile call: exercises the batch grid, VMEM-resident folded weights and
    # the masked ragged last block (200 rows, 64-row tiles, no tile padding).
    big_state = jax.random.normal(k_state2, (200, dim_state), jnp.float32)
    big_out = jax.block_until_ready(td3_actor_forward(big_state, fparams, block_b=64))
    big_ref = _ref_forward(big_state, params)
    np.testing.assert_allclose(np.asarray(big_out), np.asarray(big_ref),
                               rtol=2e-2, atol=2e-2)

    # Also exercise the other fold factor (covers both the 128- and 256-lane paths).
    other_fold = 8 if fparams[0] == 16 else 16
    fparams_alt = fold_td3_actor_params(params, fold=other_fold)
    alt_out = jax.block_until_ready(td3_actor_forward(big_state, fparams_alt, block_b=64))
    np.testing.assert_allclose(np.asarray(alt_out), np.asarray(big_ref),
                               rtol=2e-2, atol=2e-2)

    print("KERNEL_OK")
</pallas_src>

<mosaic_0001>
module attributes {stable_mosaic.version = 11 : i64} {
  func.func @_td3_actor_kernel(%arg0: i32, %arg1: memref<8x256xf32, #tpu.memory_space<vmem>>, %arg2: memref<256x512xbf16, #tpu.memory_space<vmem>>, %arg3: memref<1x512xf32, #tpu.memory_space<vmem>>, %arg4: memref<512x512xbf16, #tpu.memory_space<vmem>>, %arg5: memref<1x512xf32, #tpu.memory_space<vmem>>, %arg6: memref<512x128xbf16, #tpu.memory_space<vmem>>, %arg7: memref<2x128xf32, #tpu.memory_space<vmem>>, %arg8: memref<8x128xf32, #tpu.memory_space<vmem>>) attributes {dimension_semantics = [#tpu.dimension_semantics<parallel>], iteration_bounds = array<i64: 1>, scalar_prefetch = 0 : i64, scratch_operands = 0 : i64, tpu.core_type = #tpu.core_type<tc>, window_params = [{transform_indices = @transform_0, window_bounds = array<i64: 8, 256>}, {pipeline_mode = #tpu.pipeline_mode<synchronous>, transform_indices = @transform_1, window_bounds = array<i64: 256, 512>}, {pipeline_mode = #tpu.pipeline_mode<synchronous>, transform_indices = @transform_2, window_bounds = array<i64: 1, 512>}, {pipeline_mode = #tpu.pipeline_mode<synchronous>, transform_indices = @transform_3, window_bounds = array<i64: 512, 512>}, {pipeline_mode = #tpu.pipeline_mode<synchronous>, transform_indices = @transform_4, window_bounds = array<i64: 1, 512>}, {pipeline_mode = #tpu.pipeline_mode<synchronous>, transform_indices = @transform_5, window_bounds = array<i64: 512, 128>}, {pipeline_mode = #tpu.pipeline_mode<synchronous>, transform_indices = @transform_6, window_bounds = array<i64: 2, 128>}, {transform_indices = @transform_7, window_bounds = array<i64: 8, 128>}]} {
    %c0 = arith.constant 0 : index
    %c0_0 = arith.constant 0 : index
    %0 = vector.load %arg1[%c0, %c0_0] : memref<8x256xf32, #tpu.memory_space<vmem>>, vector<8x256xf32>
    %1 = arith.truncf %0 : vector<8x256xf32> to vector<8x256xbf16>
    %c0_1 = arith.constant 0 : index
    %c0_2 = arith.constant 0 : index
    %2 = vector.load %arg2[%c0_1, %c0_2] : memref<256x512xbf16, #tpu.memory_space<vmem>>, vector<256x512xbf16>
    %cst = arith.constant dense<0.000000e+00> : vector<8x512xf32>
    %3 = tpu.matmul %1, %2, %cst {dimension_numbers = #tpu.dot_dimension_numbers<[1], [0], [0], [1], [0, 0, 1, 1], [], []>} : vector<8x256xbf16>, vector<256x512xbf16>, vector<8x512xf32> -> vector<8x512xf32>
    %c0_3 = arith.constant 0 : index
    %c0_4 = arith.constant 0 : index
    %4 = vector.load %arg3[%c0_3, %c0_4] : memref<1x512xf32, #tpu.memory_space<vmem>>, vector<1x512xf32>
    %5 = vector.broadcast %4 : vector<1x512xf32> to vector<8x512xf32>
    %6 = arith.addf %3, %5 : vector<8x512xf32>
    %cst_5 = arith.constant 0.000000e+00 : f32
    %7 = vector.broadcast %cst_5 : f32 to vector<8x512xf32>
    %8 = arith.maximumf %6, %7 : vector<8x512xf32>
    %9 = arith.truncf %8 : vector<8x512xf32> to vector<8x512xbf16>
    %c0_6 = arith.constant 0 : index
    %c0_7 = arith.constant 0 : index
    %10 = vector.load %arg4[%c0_6, %c0_7] : memref<512x512xbf16, #tpu.memory_space<vmem>>, vector<512x512xbf16>
    %cst_8 = arith.constant dense<0.000000e+00> : vector<8x512xf32>
    %11 = tpu.matmul %9, %10, %cst_8 {dimension_numbers = #tpu.dot_dimension_numbers<[1], [0], [0], [1], [0, 0, 1, 1], [], []>} : vector<8x512xbf16>, vector<512x512xbf16>, vector<8x512xf32> -> vector<8x512xf32>
    %c0_9 = arith.constant 0 : index
    %c0_10 = arith.constant 0 : index
    %12 = vector.load %arg5[%c0_9, %c0_10] : memref<1x512xf32, #tpu.memory_space<vmem>>, vector<1x512xf32>
    %13 = vector.broadcast %12 : vector<1x512xf32> to vector<8x512xf32>
    %14 = arith.addf %11, %13 : vector<8x512xf32>
    %cst_11 = arith.constant 0.000000e+00 : f32
    %15 = vector.broadcast %cst_11 : f32 to vector<8x512xf32>
    %16 = arith.maximumf %14, %15 : vector<8x512xf32>
    %17 = arith.truncf %16 : vector<8x512xf32> to vector<8x512xbf16>
    %c0_12 = arith.constant 0 : index
    %c0_13 = arith.constant 0 : index
    %18 = vector.load %arg6[%c0_12, %c0_13] : memref<512x128xbf16, #tpu.memory_space<vmem>>, vector<512x128xbf16>
    %cst_14 = arith.constant dense<0.000000e+00> : vector<8x128xf32>
    %19 = tpu.matmul %17, %18, %cst_14 {dimension_numbers = #tpu.dot_dimension_numbers<[1], [0], [0], [1], [0, 0, 1, 1], [], []>} : vector<8x512xbf16>, vector<512x128xbf16>, vector<8x128xf32> -> vector<8x128xf32>
    %c0_15 = arith.constant 0 : index
    %c0_16 = arith.constant 0 : index
    %20 = vector.load %arg7[%c0_15, %c0_16] : memref<2x128xf32, #tpu.memory_space<vmem>>, vector<1x128xf32>
    %21 = vector.broadcast %20 : vector<1x128xf32> to vector<8x128xf32>
    %22 = arith.addf %19, %21 : vector<8x128xf32>
    %c1 = arith.constant 1 : index
    %c0_17 = arith.constant 0 : index
    %23 = vector.load %arg7[%c1, %c0_17] : memref<2x128xf32, #tpu.memory_space<vmem>>, vector<1x128xf32>
    %24 = math.tanh %22 : vector<8x128xf32>
    %25 = vector.broadcast %23 : vector<1x128xf32> to vector<8x128xf32>
    %26 = arith.mulf %25, %24 : vector<8x128xf32>
    %c0_18 = arith.constant 0 : index
    %c0_19 = arith.constant 0 : index
    %27 = vector.load %arg8[%c0_18, %c0_19] : memref<8x128xf32, #tpu.memory_space<vmem>>, vector<8x128xf32>
    tpu.vector_store %arg8[%c0_18, %c0_19], %26 {strides = array<i32>} : memref<8x128xf32, #tpu.memory_space<vmem>>, vector<8x128xf32>,
    return
  }
  func.func @transform_0(%arg0: i32) -> (i32, i32) {
    %c0_i32 = arith.constant 0 : i32
    %c0_i32_0 = arith.constant 0 : i32
    return %arg0, %c0_i32 : i32, i32
  }
  func.func @transform_1(%arg0: i32) -> (i32, i32) {
    %c0_i32 = arith.constant 0 : i32
    %c0_i32_0 = arith.constant 0 : i32
    %c0_i32_1 = arith.constant 0 : i32
    return %c0_i32, %c0_i32_0 : i32, i32
  }
  func.func @transform_2(%arg0: i32) -> (i32, i32) {
    %c0_i32 = arith.constant 0 : i32
    %c0_i32_0 = arith.constant 0 : i32
    %c0_i32_1 = arith.constant 0 : i32
    return %c0_i32, %c0_i32_0 : i32, i32
  }
  func.func @transform_3(%arg0: i32) -> (i32, i32) {
    %c0_i32 = arith.constant 0 : i32
    %c0_i32_0 = arith.constant 0 : i32
    %c0_i32_1 = arith.constant 0 : i32
    return %c0_i32, %c0_i32_0 : i32, i32
  }
  func.func @transform_4(%arg0: i32) -> (i32, i32) {
    %c0_i32 = arith.constant 0 : i32
    %c0_i32_0 = arith.constant 0 : i32
    %c0_i32_1 = arith.constant 0 : i32
    return %c0_i32, %c0_i32_0 : i32, i32
  }
  func.func @transform_5(%arg0: i32) -> (i32, i32) {
    %c0_i32 = arith.constant 0 : i32
    %c0_i32_0 = arith.constant 0 : i32
    %c0_i32_1 = arith.constant 0 : i32
    return %c0_i32, %c0_i32_0 : i32, i32
  }
  func.func @transform_6(%arg0: i32) -> (i32, i32) {
    %c0_i32 = arith.constant 0 : i32
    %c0_i32_0 = arith.constant 0 : i32
    %c0_i32_1 = arith.constant 0 : i32
    return %c0_i32, %c0_i32_0 : i32, i32
  }
  func.func @transform_7(%arg0: i32) -> (i32, i32) {
    %c0_i32 = arith.constant 0 : i32
    %c0_i32_0 = arith.constant 0 : i32
    return %arg0, %c0_i32 : i32, i32
  }
}

</mosaic_0001>

<llo_original>
// kernel: tpu_custom_call.1
$region0: #{tpu_custom_call.1}
  #allocation0 [shape = 'u32[]', space=smem, size = 0x4, offset = 0x4, fixed_abs, tag = 'smem constant byte address 0x4 - core index']
  #allocation1 [shape = 'u32[144,128]{1,0:T(1,128)}', space=vmem, size = 0x12000, scoped, tag = 'internal scratch']
  %s0 = inlined_call_operand.hbm [shape: f32[1,256], index: 0, kind: input, shape index: {}]
  %s1 = inlined_call_operand.hbm [shape: bf16[256,512], index: 1, kind: input, shape index: {}]
  %s2 = inlined_call_operand.vmem [shape: f32[1,512], index: 2, kind: input, shape index: {}]
  %s3 = inlined_call_operand.hbm [shape: bf16[512,512], index: 3, kind: input, shape index: {}]
  %s4 = inlined_call_operand.vmem [shape: f32[1,512], index: 4, kind: input, shape index: {}]
  %s5 = inlined_call_operand.hbm [shape: bf16[512,128], index: 5, kind: input, shape index: {}]
  %s6 = inlined_call_operand.vmem [shape: f32[2,128], index: 6, kind: input, shape index: {}]
  %s7 = inlined_call_operand.hbm [shape: f32[1,128], index: 7, kind: output, shape index: {}]
  %s8 = sld [smem:[#allocation0]]
  $region54: #{tpu_custom_call.1} parent=0
    _
  %s10 = ssub.s32 1, %s8
  %s11 = scalar_select 0, %s10, %s8
  $region1: #{tpu_custom_call.1} parent=0
    #allocation2 [shape = 'u8[8192]{0}', space=vmem, size = 0x2000, scoped, tag = 'input window, operand 0, single buffered']
    #allocation3 [shape = 's32[1]{0}', space=sflag, size = 0x4, scoped, tag = 'scoped memory for tpu_custom_call.1']
    #allocation4 [shape = 's32[1]{0}', space=sflag, size = 0x4, scoped, tag = 'scoped memory for tpu_custom_call.1']
    #allocation5 [shape = 'u8[262144]{0}', space=vmem, size = 0x40000, scoped, tag = 'input window, operand 1, single buffered']
    #allocation6 [shape = 's32[1]{0}', space=sflag, size = 0x4, scoped, tag = 'scoped memory for tpu_custom_call.1']
    #allocation7 [shape = 'u8[524288]{0}', space=vmem, size = 0x80000, scoped, tag = 'input window, operand 3, single buffered']
    #allocation8 [shape = 'u8[131072]{0}', space=vmem, size = 0x20000, scoped, tag = 'input window, operand 5, single buffered']
    #allocation9 [shape = 's32[1]{0}', space=sflag, size = 0x4, scoped, tag = 'scoped memory for tpu_custom_call.1']
    #allocation10 [shape = 'u8[4096]{0}', space=vmem, size = 0x1000, scoped, tag = 'output window, operand 0, single buffered']
    %12 = vsyncpa [#allocation3], 0
    %13 = vsyncpa [#allocation6], 0
    %14 = vsyncpa [#allocation9], 0
    %15 = vsyncpa [#allocation4], 0
    // Predicated region
    $region2: #{tpu_custom_call.1} parent=1 // pred_check
      _
    $region3: #{tpu_custom_call.1} parent=1 // pred_check_branch
      %17 = sbr.rel (0) target = $region5
    $region4: #{tpu_custom_call.1} parent=1 // pred_region
      %s19 = ssub.s32 256, 32
      %20 = vsyncadd [#allocation3], %s19
      %s21 = sshll.u32 [#allocation2], 4
      %s22 = int_to_ptr.vmem [resolvable:$true] %s21
      %27 = dma.hbm_to_vmem [thread:$0]  %s0, 32, %s22, [#allocation3], 32, 32, 2
    $region5: #{tpu_custom_call.1} parent=1 // pred_fallthru
      _
    // Predicated region
    $region6: #{tpu_custom_call.1} parent=1 // pred_check
      _
    $region7: #{tpu_custom_call.1} parent=1 // pred_check_branch
      %29 = sbr.rel (0) target = $region9
    $region8: #{tpu_custom_call.1} parent=1 // pred_region
      %s31 = ssub.s32 8192, 8192
      %32 = vsyncadd [#allocation6], %s31
      %s33 = sshll.u32 [#allocation5], 4
      %s34 = int_to_ptr.vmem [resolvable:$true] %s33
      %39 = dma.hbm_to_vmem [thread:$0]  %s1, 8192, %s34, [#allocation6], 256, 256, 16
    $region9: #{tpu_custom_call.1} parent=1 // pred_fallthru
      _
    // Predicated region
    $region10: #{tpu_custom_call.1} parent=1 // pred_check
      _
    $region11: #{tpu_custom_call.1} parent=1 // pred_check_branch
      %41 = sbr.rel (0) target = $region13
    $region12: #{tpu_custom_call.1} parent=1 // pred_region
      _
    $region13: #{tpu_custom_call.1} parent=1 // pred_fallthru
      _
    // Predicated region
    $region14: #{tpu_custom_call.1} parent=1 // pred_check
      _
    $region15: #{tpu_custom_call.1} parent=1 // pred_check_branch
      %43 = sbr.rel (0) target = $region17
    $region16: #{tpu_custom_call.1} parent=1 // pred_region
      %s45 = ssub.s32 16384, 16384
      %46 = vsyncadd [#allocation6], %s45
      %s47 = sshll.u32 [#allocation7], 4
      %s48 = int_to_ptr.vmem [resolvable:$true] %s47
      %53 = dma.hbm_to_vmem [thread:$0]  %s3, 16384, %s48, [#allocation6], 256, 256, 16
    $region17: #{tpu_custom_call.1} parent=1 // pred_fallthru
      _
    // Predicated region
    $region18: #{tpu_custom_call.1} parent=1 // pred_check
      _
    $region19: #{tpu_custom_call.1} parent=1 // pred_check_branch
      %55 = sbr.rel (0) target = $region21
    $region20: #{tpu_custom_call.1} parent=1 // pred_region
      _
    $region21: #{tpu_custom_call.1} parent=1 // pred_fallthru
      _
    // Predicated region
    $region22: #{tpu_custom_call.1} parent=1 // pred_check
      _
    $region23: #{tpu_custom_call.1} parent=1 // pred_check_branch
      %57 = sbr.rel (0) target = $region25
    $region24: #{tpu_custom_call.1} parent=1 // pred_region
      %s59 = ssub.s32 4096, 4096
      %60 = vsyncadd [#allocation9], %s59
      %s61 = sshll.u32 [#allocation8], 4
      %s62 = int_to_ptr.vmem [resolvable:$true] %s61
      %67 = dma.hbm_to_vmem [thread:$0]  %s5, 4096, %s62, [#allocation9], 64, 64, 4
    $region25: #{tpu_custom_call.1} parent=1 // pred_fallthru
      _
    // Predicated region
    $region26: #{tpu_custom_call.1} parent=1 // pred_check
      _
    $region27: #{tpu_custom_call.1} parent=1 // pred_check_branch
      %69 = sbr.rel (0) target = $region29
    $region28: #{tpu_custom_call.1} parent=1 // pred_region
      _
    $region29: #{tpu_custom_call.1} parent=1 // pred_fallthru
      _
    // Predicated region
    $region30: #{tpu_custom_call.1} parent=1 // pred_check
      _
    $region31: #{tpu_custom_call.1} parent=1 // pred_check_branch
      %71 = sbr.rel (0) target = $region33
    $region32: #{tpu_custom_call.1} parent=1 // pred_region
      %72 = dma.done [#allocation3], 256
    $region33: #{tpu_custom_call.1} parent=1 // pred_fallthru
      _
    // Predicated region
    $region34: #{tpu_custom_call.1} parent=1 // pred_check
      _
    $region35: #{tpu_custom_call.1} parent=1 // pred_check_branch
      %74 = sbr.rel (0) target = $region37
    $region36: #{tpu_custom_call.1} parent=1 // pred_region
      %75 = dma.done [#allocation6], 8192
    $region37: #{tpu_custom_call.1} parent=1 // pred_fallthru
      _
    // Predicated region
    $region38: #{tpu_custom_call.1} parent=1 // pred_check
      _
    $region39: #{tpu_custom_call.1} parent=1 // pred_check_branch
      %77 = sbr.rel (0) target = $region41
    $region40: #{tpu_custom_call.1} parent=1 // pred_region
      %78 = dma.done [#allocation6], 16384
    $region41: #{tpu_custom_call.1} parent=1 // pred_fallthru
      _
    // Predicated region
    $region42: #{tpu_custom_call.1} parent=1 // pred_check
      _
    $region43: #{tpu_custom_call.1} parent=1 // pred_check_branch
      %80 = sbr.rel (0) target = $region45
    $region44: #{tpu_custom_call.1} parent=1 // pred_region
      %81 = dma.done [#allocation9], 4096
    $region45: #{tpu_custom_call.1} parent=1 // pred_fallthru
      _
    %v83 = vld [vmem:[#allocation2] sm:$0x3]
    %v84 = vld [vmem:[#allocation2 + $0x2] sm:$0x3]
    %v85 = vld [vmem:[#allocation2 + $0x4] sm:$0x3]
    %v86 = vld [vmem:[#allocation2 + $0x6] sm:$0x3]
    %v87 = vld [vmem:[#allocation2 + $0x8] sm:$0x3]
    %v88 = vld [vmem:[#allocation2 + $0xa] sm:$0x3]
    %v89 = vld [vmem:[#allocation2 + $0xc] sm:$0x3]
    %v90 = vld [vmem:[#allocation2 + $0xe] sm:$0x3]
    %v99 = vcombine.low %v83, %v84
    %v100 = vcombine.low %v85, %v86
    %v101 = vcombine.low %v87, %v88
    %v102 = vcombine.low %v89, %v90
    %v104 = vunpack.c.l.s4 1966171168
    %v105 = vunpack.c.0.s8 %v104
    %v106 = vlaneseq
    %v107 = vshrl.u32 %v106, 7
    %v108 = vsub.s32 %v105, %v107
    %v109 = vrot.slane %v99, %v108
    %v111 = vunpack.c.l.s4 1966171168
    %v112 = vunpack.c.0.s8 %v111
    %v113 = vlaneseq
    %v114 = vshrl.u32 %v113, 7
    %v115 = vsub.s32 %v112, %v114
    %v116 = vrot.slane %v100, %v115
    %v118 = vunpack.c.l.s4 1966171168
    %v119 = vunpack.c.0.s8 %v118
    %v120 = vlaneseq
    %v121 = vshrl.u32 %v120, 7
    %v122 = vsub.s32 %v119, %v121
    %v123 = vrot.slane %v101, %v122
    %v125 = vunpack.c.l.s4 1966171168
    %v126 = vunpack.c.0.s8 %v125
    %v127 = vlaneseq
    %v128 = vshrl.u32 %v127, 7
    %v129 = vsub.s32 %v126, %v128
    %v130 = vrot.slane %v102, %v129
    %v131 = vcombine.low %v109, %v116
    %v132 = vcombine.high %v109, %v116
    %v133 = vcombine.low %v123, %v130
    %v134 = vcombine.high %v123, %v130
    %v136 = vunpack.c.l.s4 1966171168
    %v137 = vunpack.c.0.s8 %v136
    %v138 = vlaneseq
    %v139 = vshrl.u32 %v138, 7
    %v140 = vsub.s32 %v137, %v139
    %v141 = vrot.slane %v131, %v140
    %v143 = vunpack.c.l.s4 1966171168
    %v144 = vunpack.c.0.s8 %v143
    %v145 = vlaneseq
    %v146 = vshrl.u32 %v145, 7
    %v147 = vsub.s32 %v144, %v146
    %v148 = vrot.slane %v132, %v147
    %v150 = vunpack.c.l.s4 1966171168
    %v151 = vunpack.c.0.s8 %v150
    %v152 = vlaneseq
    %v153 = vshrl.u32 %v152, 7
    %v154 = vsub.s32 %v151, %v153
    %v155 = vrot.slane %v133, %v154
    %v157 = vunpack.c.l.s4 1966171168
    %v158 = vunpack.c.0.s8 %v157
    %v159 = vlaneseq
    %v160 = vshrl.u32 %v159, 7
    %v161 = vsub.s32 %v158, %v160
    %v162 = vrot.slane %v134, %v161
    %v163 = vcombine.low %v141, %v155
    %v164 = vcombine.low %v148, %v162
    %v167 = vpack.c.bf16 %v163, %v163
    %v168 = vpack.c.bf16 %v164, %v164
    %v169 = vld [vmem:[#allocation5] sm:$0xff]
    %v170 = vld [vmem:[#allocation5 + $0x8] sm:$0xff]
    %v171 = vld [vmem:[#allocation5 + $0x10] sm:$0xff]
    %v172 = vld [vmem:[#allocation5 + $0x18] sm:$0xff]
    %v173 = vld [vmem:[#allocation5 + $0x20] sm:$0xff]
    %v174 = vld [vmem:[#allocation5 + $0x28] sm:$0xff]
    %v175 = vld [vmem:[#allocation5 + $0x30] sm:$0xff]
    %v176 = vld [vmem:[#allocation5 + $0x38] sm:$0xff]
    %v177 = vld [vmem:[#allocation5 + $0x40] sm:$0xff]
    %v178 = vld [vmem:[#allocation5 + $0x48] sm:$0xff]
    %v179 = vld [vmem:[#allocation5 + $0x50] sm:$0xff]
    %v180 = vld [vmem:[#allocation5 + $0x58] sm:$0xff]
    %v181 = vld [vmem:[#allocation5 + $0x60] sm:$0xff]
    %v182 = vld [vmem:[#allocation5 + $0x68] sm:$0xff]
    %v183 = vld [vmem:[#allocation5 + $0x70] sm:$0xff]
    %v184 = vld [vmem:[#allocation5 + $0x78] sm:$0xff]
    %v185 = vld [vmem:[#allocation5 + $0x80] sm:$0xff]
    %v186 = vld [vmem:[#allocation5 + $0x88] sm:$0xff]
    %v187 = vld [vmem:[#allocation5 + $0x90] sm:$0xff]
    %v188 = vld [vmem:[#allocation5 + $0x98] sm:$0xff]
    %v189 = vld [vmem:[#allocation5 + $0xa0] sm:$0xff]
    %v190 = vld [vmem:[#allocation5 + $0xa8] sm:$0xff]
    %v191 = vld [vmem:[#allocation5 + $0xb0] sm:$0xff]
    %v192 = vld [vmem:[#allocation5 + $0xb8] sm:$0xff]
    %v193 = vld [vmem:[#allocation5 + $0xc0] sm:$0xff]
    %v194 = vld [vmem:[#allocation5 + $0xc8] sm:$0xff]
    %v195 = vld [vmem:[#allocation5 + $0xd0] sm:$0xff]
    %v196 = vld [vmem:[#allocation5 + $0xd8] sm:$0xff]
    %v197 = vld [vmem:[#allocation5 + $0xe0] sm:$0xff]
    %v198 = vld [vmem:[#allocation5 + $0xe8] sm:$0xff]
    %v199 = vld [vmem:[#allocation5 + $0xf0] sm:$0xff]
    %v200 = vld [vmem:[#allocation5 + $0xf8] sm:$0xff]
    %v201 = vld [vmem:[#allocation5 + $0x100] sm:$0xff]
    %v202 = vld [vmem:[#allocation5 + $0x108] sm:$0xff]
    %v203 = vld [vmem:[#allocation5 + $0x110] sm:$0xff]
    %v204 = vld [vmem:[#allocation5 + $0x118] sm:$0xff]
    %v205 = vld [vmem:[#allocation5 + $0x120] sm:$0xff]
    %v206 = vld [vmem:[#allocation5 + $0x128] sm:$0xff]
    %v207 = vld [vmem:[#allocation5 + $0x130] sm:$0xff]
    %v208 = vld [vmem:[#allocation5 + $0x138] sm:$0xff]
    %v209 = vld [vmem:[#allocation5 + $0x140] sm:$0xff]
    %v210 = vld [vmem:[#allocation5 + $0x148] sm:$0xff]
    %v211 = vld [vmem:[#allocation5 + $0x150] sm:$0xff]
    %v212 = vld [vmem:[#allocation5 + $0x158] sm:$0xff]
    %v213 = vld [vmem:[#allocation5 + $0x160] sm:$0xff]
    %v214 = vld [vmem:[#allocation5 + $0x168] sm:$0xff]
    %v215 = vld [vmem:[#allocation5 + $0x170] sm:$0xff]
    %v216 = vld [vmem:[#allocation5 + $0x178] sm:$0xff]
    %v217 = vld [vmem:[#allocation5 + $0x180] sm:$0xff]
    %v218 = vld [vmem:[#allocation5 + $0x188] sm:$0xff]
    %v219 = vld [vmem:[#allocation5 + $0x190] sm:$0xff]
    %v220 = vld [vmem:[#allocation5 + $0x198] sm:$0xff]
    %v221 = vld [vmem:[#allocation5 + $0x1a0] sm:$0xff]
    %v222 = vld [vmem:[#allocation5 + $0x1a8] sm:$0xff]
    %v223 = vld [vmem:[#allocation5 + $0x1b0] sm:$0xff]
    %v224 = vld [vmem:[#allocation5 + $0x1b8] sm:$0xff]
    %v225 = vld [vmem:[#allocation5 + $0x1c0] sm:$0xff]
    %v226 = vld [vmem:[#allocation5 + $0x1c8] sm:$0xff]
    %v227 = vld [vmem:[#allocation5 + $0x1d0] sm:$0xff]
    %v228 = vld [vmem:[#allocation5 + $0x1d8] sm:$0xff]
    %v229 = vld [vmem:[#allocation5 + $0x1e0] sm:$0xff]
    %v230 = vld [vmem:[#allocation5 + $0x1e8] sm:$0xff]
    %v231 = vld [vmem:[#allocation5 + $0x1f0] sm:$0xff]
    %v232 = vld [vmem:[#allocation5 + $0x1f8] sm:$0xff]
    %v233 = vld [vmem:[%s2] sm:$0xf]
    %v235 = vlaneseq
    %v236 = vshrl.u32 %v235, 7
    %v237 = vsub.s32 0, %v236
    %v238 = vrot.slane %v233, %v237
    %v239 = vlaneseq
    %v240 = vshrl.u32 %v239, 7
    %v241 = vsub.s32 1, %v240
    %v242 = vrot.slane %v233, %v241
    %v243 = vlaneseq
    %v244 = vshrl.u32 %v243, 7
    %v245 = vsub.s32 2, %v244
    %v246 = vrot.slane %v233, %v245
    %v247 = vlaneseq
    %v248 = vshrl.u32 %v247, 7
    %v249 = vsub.s32 3, %v248
    %v250 = vrot.slane %v233, %v249
    %v319 = vunpack.c.l.b16 %v169
    %v320 = vunpack.c.h.b16 %v169
    %v321 = vunpack.c.l.b16 %v170
    %v322 = vunpack.c.h.b16 %v170
    %v323 = vunpack.c.l.b16 %v171
    %v324 = vunpack.c.h.b16 %v171
    %v325 = vunpack.c.l.b16 %v172
    %v326 = vunpack.c.h.b16 %v172
    %v327 = vunpack.c.l.b16 %v173
    %v328 = vunpack.c.h.b16 %v173
    %v329 = vunpack.c.l.b16 %v174
    %v330 = vunpack.c.h.b16 %v174
    %v331 = vunpack.c.l.b16 %v175
    %v332 = vunpack.c.h.b16 %v175
    %v333 = vunpack.c.l.b16 %v176
    %v334 = vunpack.c.h.b16 %v176
    %v335 = vunpack.c.l.b16 %v177
    %v336 = vunpack.c.h.b16 %v177
    %v337 = vunpack.c.l.b16 %v178
    %v338 = vunpack.c.h.b16 %v178
    %v339 = vunpack.c.l.b16 %v179
    %v340 = vunpack.c.h.b16 %v179
    %v341 = vunpack.c.l.b16 %v180
    %v342 = vunpack.c.h.b16 %v180
    %v343 = vunpack.c.l.b16 %v181
    %v344 = vunpack.c.h.b16 %v181
    %v345 = vunpack.c.l.b16 %v182
    %v346 = vunpack.c.h.b16 %v182
    %v347 = vunpack.c.l.b16 %v183
    %v348 = vunpack.c.h.b16 %v183
    %v349 = vunpack.c.l.b16 %v184
    %v350 = vunpack.c.h.b16 %v184
    %v351 = vunpack.c.l.b16 %v185
    %v352 = vunpack.c.h.b16 %v185
    %v353 = vunpack.c.l.b16 %v186
    %v354 = vunpack.c.h.b16 %v186
    %v355 = vunpack.c.l.b16 %v187
    %v356 = vunpack.c.h.b16 %v187
    %v357 = vunpack.c.l.b16 %v188
    %v358 = vunpack.c.h.b16 %v188
    %v359 = vunpack.c.l.b16 %v189
    %v360 = vunpack.c.h.b16 %v189
    %v361 = vunpack.c.l.b16 %v190
    %v362 = vunpack.c.h.b16 %v190
    %v363 = vunpack.c.l.b16 %v191
    %v364 = vunpack.c.h.b16 %v191
    %v365 = vunpack.c.l.b16 %v192
    %v366 = vunpack.c.h.b16 %v192
    %v367 = vunpack.c.l.b16 %v193
    %v368 = vunpack.c.h.b16 %v193
    %v369 = vunpack.c.l.b16 %v194
    %v370 = vunpack.c.h.b16 %v194
    %v371 = vunpack.c.l.b16 %v195
    %v372 = vunpack.c.h.b16 %v195
    %v373 = vunpack.c.l.b16 %v196
    %v374 = vunpack.c.h.b16 %v196
    %v375 = vunpack.c.l.b16 %v197
    %v376 = vunpack.c.h.b16 %v197
    %v377 = vunpack.c.l.b16 %v198
    %v378 = vunpack.c.h.b16 %v198
    %v379 = vunpack.c.l.b16 %v199
    %v380 = vunpack.c.h.b16 %v199
    %v381 = vunpack.c.l.b16 %v200
    %v382 = vunpack.c.h.b16 %v200
    %v383 = vunpack.c.l.b16 %v201
    %v384 = vunpack.c.h.b16 %v201
    %v385 = vunpack.c.l.b16 %v202
    %v386 = vunpack.c.h.b16 %v202
    %v387 = vunpack.c.l.b16 %v203
    %v388 = vunpack.c.h.b16 %v203
    %v389 = vunpack.c.l.b16 %v204
    %v390 = vunpack.c.h.b16 %v204
    %v391 = vunpack.c.l.b16 %v205
    %v392 = vunpack.c.h.b16 %v205
    %v393 = vunpack.c.l.b16 %v206
    %v394 = vunpack.c.h.b16 %v206
    %v395 = vunpack.c.l.b16 %v207
    %v396 = vunpack.c.h.b16 %v207
    %v397 = vunpack.c.l.b16 %v208
    %v398 = vunpack.c.h.b16 %v208
    %v399 = vunpack.c.l.b16 %v209
    %v400 = vunpack.c.h.b16 %v209
    %v401 = vunpack.c.l.b16 %v210
    %v402 = vunpack.c.h.b16 %v210
    %v403 = vunpack.c.l.b16 %v211
    %v404 = vunpack.c.h.b16 %v211
    %v405 = vunpack.c.l.b16 %v212
    %v406 = vunpack.c.h.b16 %v212
    %v407 = vunpack.c.l.b16 %v213
    %v408 = vunpack.c.h.b16 %v213
    %v409 = vunpack.c.l.b16 %v214
    %v410 = vunpack.c.h.b16 %v214
    %v411 = vunpack.c.l.b16 %v215
    %v412 = vunpack.c.h.b16 %v215
    %v413 = vunpack.c.l.b16 %v216
    %v414 = vunpack.c.h.b16 %v216
    %v415 = vunpack.c.l.b16 %v217
    %v416 = vunpack.c.h.b16 %v217
    %v417 = vunpack.c.l.b16 %v218
    %v418 = vunpack.c.h.b16 %v218
    %v419 = vunpack.c.l.b16 %v219
    %v420 = vunpack.c.h.b16 %v219
    %v421 = vunpack.c.l.b16 %v220
    %v422 = vunpack.c.h.b16 %v220
    %v423 = vunpack.c.l.b16 %v221
    %v424 = vunpack.c.h.b16 %v221
    %v425 = vunpack.c.l.b16 %v222
    %v426 = vunpack.c.h.b16 %v222
    %v427 = vunpack.c.l.b16 %v223
    %v428 = vunpack.c.h.b16 %v223
    %v429 = vunpack.c.l.b16 %v224
    %v430 = vunpack.c.h.b16 %v224
    %v431 = vunpack.c.l.b16 %v225
    %v432 = vunpack.c.h.b16 %v225
    %v433 = vunpack.c.l.b16 %v226
    %v434 = vunpack.c.h.b16 %v226
    %v435 = vunpack.c.l.b16 %v227
    %v436 = vunpack.c.h.b16 %v227
    %v437 = vunpack.c.l.b16 %v228
    %v438 = vunpack.c.h.b16 %v228
    %v439 = vunpack.c.l.b16 %v229
    %v440 = vunpack.c.h.b16 %v229
    %v441 = vunpack.c.l.b16 %v230
    %v442 = vunpack.c.h.b16 %v230
    %v443 = vunpack.c.l.b16 %v231
    %v444 = vunpack.c.h.b16 %v231
    %v445 = vunpack.c.l.b16 %v232
    %v446 = vunpack.c.h.b16 %v232
    %v447 = vpack.c.b16 %v323, %v319
    %v448 = vpack.c.b16 %v324, %v320
    %v449 = vpack.c.b16 %v325, %v321
    %v450 = vpack.c.b16 %v326, %v322
    %v451 = vpack.c.b16 %v331, %v327
    %v452 = vpack.c.b16 %v332, %v328
    %v453 = vpack.c.b16 %v333, %v329
    %v454 = vpack.c.b16 %v334, %v330
    %v455 = vpack.c.b16 %v339, %v335
    %v456 = vpack.c.b16 %v340, %v336
    %v457 = vpack.c.b16 %v341, %v337
    %v458 = vpack.c.b16 %v342, %v338
    %v459 = vpack.c.b16 %v347, %v343
    %v460 = vpack.c.b16 %v348, %v344
    %v461 = vpack.c.b16 %v349, %v345
    %v462 = vpack.c.b16 %v350, %v346
    %v463 = vpack.c.b16 %v355, %v351
    %v464 = vpack.c.b16 %v356, %v352
    %v465 = vpack.c.b16 %v357, %v353
    %v466 = vpack.c.b16 %v358, %v354
    %v467 = vpack.c.b16 %v363, %v359
    %v468 = vpack.c.b16 %v364, %v360
    %v469 = vpack.c.b16 %v365, %v361
    %v470 = vpack.c.b16 %v366, %v362
    %v471 = vpack.c.b16 %v371, %v367
    %v472 = vpack.c.b16 %v372, %v368
    %v473 = vpack.c.b16 %v373, %v369
    %v474 = vpack.c.b16 %v374, %v370
    %v475 = vpack.c.b16 %v379, %v375
    %v476 = vpack.c.b16 %v380, %v376
    %v477 = vpack.c.b16 %v381, %v377
    %v478 = vpack.c.b16 %v382, %v378
    %v479 = vpack.c.b16 %v387, %v383
    %v480 = vpack.c.b16 %v388, %v384
    %v481 = vpack.c.b16 %v389, %v385
    %v482 = vpack.c.b16 %v390, %v386
    %v483 = vpack.c.b16 %v395, %v391
    %v484 = vpack.c.b16 %v396, %v392
    %v485 = vpack.c.b16 %v397, %v393
    %v486 = vpack.c.b16 %v398, %v394
    %v487 = vpack.c.b16 %v403, %v399
    %v488 = vpack.c.b16 %v404, %v400
    %v489 = vpack.c.b16 %v405, %v401
    %v490 = vpack.c.b16 %v406, %v402
    %v491 = vpack.c.b16 %v411, %v407
    %v492 = vpack.c.b16 %v412, %v408
    %v493 = vpack.c.b16 %v413, %v409
    %v494 = vpack.c.b16 %v414, %v410
    %v495 = vpack.c.b16 %v419, %v415
    %v496 = vpack.c.b16 %v420, %v416
    %v497 = vpack.c.b16 %v421, %v417
    %v498 = vpack.c.b16 %v422, %v418
    %v499 = vpack.c.b16 %v427, %v423
    %v500 = vpack.c.b16 %v428, %v424
    %v501 = vpack.c.b16 %v429, %v425
    %v502 = vpack.c.b16 %v430, %v426
    %v503 = vpack.c.b16 %v435, %v431
    %v504 = vpack.c.b16 %v436, %v432
    %v505 = vpack.c.b16 %v437, %v433
    %v506 = vpack.c.b16 %v438, %v434
    %v507 = vpack.c.b16 %v443, %v439
    %v508 = vpack.c.b16 %v444, %v440
    %v509 = vpack.c.b16 %v445, %v441
    %v510 = vpack.c.b16 %v446, %v442
    %575 = vmatprep.subr.bf16.mxu0 %v448
    %576 = vmatpush1.bf16.msra.mxu0 %v447
    %577 = vmatprep.subr.bf16.mxu0 %v452
    %578 = vmatpush1.bf16.msra.mxu0 %v451
    %579 = vmatprep.subr.bf16.mxu0 %v456
    %580 = vmatpush1.bf16.msra.mxu0 %v455
    %581 = vmatprep.subr.bf16.mxu0 %v460
    %582 = vmatpush1.bf16.msra.mxu0 %v459
    %583 = vmatprep.subr.bf16.mxu0 %v464
    %584 = vmatpush1.bf16.msra.mxu0 %v463
    %585 = vmatprep.subr.bf16.mxu0 %v468
    %586 = vmatpush1.bf16.msra.mxu0 %v467
    %587 = vmatprep.subr.bf16.mxu0 %v472
    %588 = vmatpush1.bf16.msra.mxu0 %v471
    %589 = vmatprep.subr.bf16.mxu0 %v476
    %590 = vmatpush1.bf16.msra.mxu0 %v475
    %591 = vmatprep.subr.bf16.mxu0 %v480
    %592 = vmatpush1.bf16.msra.mxu0 %v479
    %593 = vmatprep.subr.bf16.mxu0 %v484
    %594 = vmatpush1.bf16.msra.mxu0 %v483
    %595 = vmatprep.subr.bf16.mxu0 %v488
    %596 = vmatpush1.bf16.msra.mxu0 %v487
    %597 = vmatprep.subr.bf16.mxu0 %v492
    %598 = vmatpush1.bf16.msra.mxu0 %v491
    %599 = vmatprep.subr.bf16.mxu0 %v496
    %600 = vmatpush1.bf16.msra.mxu0 %v495
    %601 = vmatprep.subr.bf16.mxu0 %v500
    %602 = vmatpush1.bf16.msra.mxu0 %v499
    %603 = vmatprep.subr.bf16.mxu0 %v504
    %604 = vmatpush1.bf16.msra.mxu0 %v503
    %605 = vmatprep.subr.bf16.mxu0 %v508
    %606 = vmatpush1.bf16.msra.mxu0 %v507
    %607 = vmatprep.mubr.bf16.mxu0 %v168
    %608 = vmatmul.mubr.bf16.gmra.mrb[0].mxu0 %v167
    %v609 = vpop.f32.mrb[0].mxu0
    %v610 = vadd.f32 %v238, %v609
    %v611 = vpop.f32.mrb[0].mxu0
    %v612 = vadd.f32 %v242, %v611
    %v613 = vpop.f32.mrb[0].mxu0
    %v614 = vpop.f32.mrb[0].mxu0
    %615 = vdwg.mxu0
    %616 = vmatprep.subr.bf16.mxu0 %v450
    %617 = vmatpush1.bf16.msra.mxu0 %v449
    %618 = vmatprep.subr.bf16.mxu0 %v454
    %619 = vmatpush1.bf16.msra.mxu0 %v453
    %620 = vmatprep.subr.bf16.mxu0 %v458
    %621 = vmatpush1.bf16.msra.mxu0 %v457
    %622 = vmatprep.subr.bf16.mxu0 %v462
    %623 = vmatpush1.bf16.msra.mxu0 %v461
    %624 = vmatprep.subr.bf16.mxu0 %v466
    %625 = vmatpush1.bf16.msra.mxu0 %v465
    %626 = vmatprep.subr.bf16.mxu0 %v470
    %627 = vmatpush1.bf16.msra.mxu0 %v469
    %628 = vmatprep.subr.bf16.mxu0 %v474
    %629 = vmatpush1.bf16.msra.mxu0 %v473
    %630 = vmatprep.subr.bf16.mxu0 %v478
    %631 = vmatpush1.bf16.msra.mxu0 %v477
    %632 = vmatprep.subr.bf16.mxu0 %v482
    %633 = vmatpush1.bf16.msra.mxu0 %v481
    %634 = vmatprep.subr.bf16.mxu0 %v486
    %635 = vmatpush1.bf16.msra.mxu0 %v485
    %636 = vmatprep.subr.bf16.mxu0 %v490
    %637 = vmatpush1.bf16.msra.mxu0 %v489
    %638 = vmatprep.subr.bf16.mxu0 %v494
    %639 = vmatpush1.bf16.msra.mxu0 %v493
    %640 = vmatprep.subr.bf16.mxu0 %v498
    %641 = vmatpush1.bf16.msra.mxu0 %v497
    %642 = vmatprep.subr.bf16.mxu0 %v502
    %643 = vmatpush1.bf16.msra.mxu0 %v501
    %644 = vmatprep.subr.bf16.mxu0 %v506
    %645 = vmatpush1.bf16.msra.mxu0 %v505
    %646 = vmatprep.subr.bf16.mxu0 %v510
    %647 = vmatpush1.bf16.msra.mxu0 %v509
    %648 = vmatprep.mubr.bf16.mxu0 %v168
    %649 = vmatmul.mubr.bf16.gmra.mrb[0].mxu0 %v167
    %v650 = vpop.f32.mrb[0].mxu0
    %v651 = vadd.f32 %v246, %v650
    %v652 = vpop.f32.mrb[0].mxu0
    %v653 = vadd.f32 %v250, %v652
    %v654 = vpop.f32.mrb[0].mxu0
    %v655 = vpop.f32.mrb[0].mxu0
    %656 = vdwg.mxu0
    %v657 = vmax.f32 %v610, 0.0
    %v658 = vmax.f32 %v612, 0.0
    %v659 = vmax.f32 %v651, 0.0
    %v660 = vmax.f32 %v653, 0.0
    %v661 = vpack.c.bf16 %v657, %v657
    %v662 = vpack.c.bf16 %v658, %v658
    %v663 = vpack.c.bf16 %v659, %v659
    %v664 = vpack.c.bf16 %v660, %v660
    %v665 = vld [vmem:[#allocation7] sm:$0xff]
    %v666 = vld [vmem:[#allocation7 + $0x8] sm:$0xff]
    %v667 = vld [vmem:[#allocation7 + $0x10] sm:$0xff]
    %v668 = vld [vmem:[#allocation7 + $0x18] sm:$0xff]
    %v669 = vld [vmem:[#allocation7 + $0x20] sm:$0xff]
    %v670 = vld [vmem:[#allocation7 + $0x28] sm:$0xff]
    %v671 = vld [vmem:[#allocation7 + $0x30] sm:$0xff]
    %v672 = vld [vmem:[#allocation7 + $0x38] sm:$0xff]
    %v673 = vld [vmem:[#allocation7 + $0x40] sm:$0xff]
    %v674 = vld [vmem:[#allocation7 + $0x48] sm:$0xff]
    %v675 = vld [vmem:[#allocation7 + $0x50] sm:$0xff]
    %v676 = vld [vmem:[#allocation7 + $0x58] sm:$0xff]
    %v677 = vld [vmem:[#allocation7 + $0x60] sm:$0xff]
    %v678 = vld [vmem:[#allocation7 + $0x68] sm:$0xff]
    %v679 = vld [vmem:[#allocation7 + $0x70] sm:$0xff]
    %v680 = vld [vmem:[#allocation7 + $0x78] sm:$0xff]
    %v681 = vld [vmem:[#allocation7 + $0x80] sm:$0xff]
    %v682 = vld [vmem:[#allocation7 + $0x88] sm:$0xff]
    %v683 = vld [vmem:[#allocation7 + $0x90] sm:$0xff]
    %v684 = vld [vmem:[#allocation7 + $0x98] sm:$0xff]
    %v685 = vld [vmem:[#allocation7 + $0xa0] sm:$0xff]
    %v686 = vld [vmem:[#allocation7 + $0xa8] sm:$0xff]
    %v687 = vld [vmem:[#allocation7 + $0xb0] sm:$0xff]
    %v688 = vld [vmem:[#allocation7 + $0xb8] sm:$0xff]
    %v689 = vld [vmem:[#allocation7 + $0xc0] sm:$0xff]
    %v690 = vld [vmem:[#allocation7 + $0xc8] sm:$0xff]
    %v691 = vld [vmem:[#allocation7 + $0xd0] sm:$0xff]
    %v692 = vld [vmem:[#allocation7 + $0xd8] sm:$0xff]
    %v693 = vld [vmem:[#allocation7 + $0xe0] sm:$0xff]
    %v694 = vld [vmem:[#allocation7 + $0xe8] sm:$0xff]
    %v695 = vld [vmem:[#allocation7 + $0xf0] sm:$0xff]
    %v696 = vld [vmem:[#allocation7 + $0xf8] sm:$0xff]
    %v697 = vld [vmem:[#allocation7 + $0x100] sm:$0xff]
    %v698 = vld [vmem:[#allocation7 + $0x108] sm:$0xff]
    %v699 = vld [vmem:[#allocation7 + $0x110] sm:$0xff]
    %v700 = vld [vmem:[#allocation7 + $0x118] sm:$0xff]
    %v701 = vld [vmem:[#allocation7 + $0x120] sm:$0xff]
    %v702 = vld [vmem:[#allocation7 + $0x128] sm:$0xff]
    %v703 = vld [vmem:[#allocation7 + $0x130] sm:$0xff]
    %v704 = vld [vmem:[#allocation7 + $0x138] sm:$0xff]
    %v705 = vld [vmem:[#allocation7 + $0x140] sm:$0xff]
    %v706 = vld [vmem:[#allocation7 + $0x148] sm:$0xff]
    %v707 = vld [vmem:[#allocation7 + $0x150] sm:$0xff]
    %v708 = vld [vmem:[#allocation7 + $0x158] sm:$0xff]
    %v709 = vld [vmem:[#allocation7 + $0x160] sm:$0xff]
    %v710 = vld [vmem:[#allocation7 + $0x168] sm:$0xff]
    %v711 = vld [vmem:[#allocation7 + $0x170] sm:$0xff]
    %v712 = vld [vmem:[#allocation7 + $0x178] sm:$0xff]
    %v713 = vld [vmem:[#allocation7 + $0x180] sm:$0xff]
    %v714 = vld [vmem:[#allocation7 + $0x188] sm:$0xff]
    %v715 = vld [vmem:[#allocation7 + $0x190] sm:$0xff]
    %v716 = vld [vmem:[#allocation7 + $0x198] sm:$0xff]
    %v717 = vld [vmem:[#allocation7 + $0x1a0] sm:$0xff]
    %v718 = vld [vmem:[#allocation7 + $0x1a8] sm:$0xff]
    %v719 = vld [vmem:[#allocation7 + $0x1b0] sm:$0xff]
    %v720 = vld [vmem:[#allocation7 + $0x1b8] sm:$0xff]
    %v721 = vld [vmem:[#allocation7 + $0x1c0] sm:$0xff]
    %v722 = vld [vmem:[#allocation7 + $0x1c8] sm:$0xff]
    %v723 = vld [vmem:[#allocation7 + $0x1d0] sm:$0xff]
    %v724 = vld [vmem:[#allocation7 + $0x1d8] sm:$0xff]
    %v725 = vld [vmem:[#allocation7 + $0x1e0] sm:$0xff]
    %v726 = vld [vmem:[#allocation7 + $0x1e8] sm:$0xff]
    %v727 = vld [vmem:[#allocation7 + $0x1f0] sm:$0xff]
    %v728 = vld [vmem:[#allocation7 + $0x1f8] sm:$0xff]
    %v729 = vld [vmem:[#allocation7 + $0x200] sm:$0xff]
    %v730 = vld [vmem:[#allocation7 + $0x208] sm:$0xff]
    %v731 = vld [vmem:[#allocation7 + $0x210] sm:$0xff]
    %v732 = vld [vmem:[#allocation7 + $0x218] sm:$0xff]
    %v733 = vld [vmem:[#allocation7 + $0x220] sm:$0xff]
    %v734 = vld [vmem:[#allocation7 + $0x228] sm:$0xff]
    %v735 = vld [vmem:[#allocation7 + $0x230] sm:$0xff]
    %v736 = vld [vmem:[#allocation7 + $0x238] sm:$0xff]
    %v737 = vld [vmem:[#allocation7 + $0x240] sm:$0xff]
    %v738 = vld [vmem:[#allocation7 + $0x248] sm:$0xff]
    %v739 = vld [vmem:[#allocation7 + $0x250] sm:$0xff]
    %v740 = vld [vmem:[#allocation7 + $0x258] sm:$0xff]
    %v741 = vld [vmem:[#allocation7 + $0x260] sm:$0xff]
    %v742 = vld [vmem:[#allocation7 + $0x268] sm:$0xff]
    %v743 = vld [vmem:[#allocation7 + $0x270] sm:$0xff]
    %v744 = vld [vmem:[#allocation7 + $0x278] sm:$0xff]
    %v745 = vld [vmem:[#allocation7 + $0x280] sm:$0xff]
    %v746 = vld [vmem:[#allocation7 + $0x288] sm:$0xff]
    %v747 = vld [vmem:[#allocation7 + $0x290] sm:$0xff]
    %v748 = vld [vmem:[#allocation7 + $0x298] sm:$0xff]
    %v749 = vld [vmem:[#allocation7 + $0x2a0] sm:$0xff]
    %v750 = vld [vmem:[#allocation7 + $0x2a8] sm:$0xff]
    %v751 = vld [vmem:[#allocation7 + $0x2b0] sm:$0xff]
    %v752 = vld [vmem:[#allocation7 + $0x2b8] sm:$0xff]
    %v753 = vld [vmem:[#allocation7 + $0x2c0] sm:$0xff]
    %v754 = vld [vmem:[#allocation7 + $0x2c8] sm:$0xff]
    %v755 = vld [vmem:[#allocation7 + $0x2d0] sm:$0xff]
    %v756 = vld [vmem:[#allocation7 + $0x2d8] sm:$0xff]
    %v757 = vld [vmem:[#allocation7 + $0x2e0] sm:$0xff]
    %v758 = vld [vmem:[#allocation7 + $0x2e8] sm:$0xff]
    %v759 = vld [vmem:[#allocation7 + $0x2f0] sm:$0xff]
    %v760 = vld [vmem:[#allocation7 + $0x2f8] sm:$0xff]
    %v761 = vld [vmem:[#allocation7 + $0x300] sm:$0xff]
    %v762 = vld [vmem:[#allocation7 + $0x308] sm:$0xff]
    %v763 = vld [vmem:[#allocation7 + $0x310] sm:$0xff]
    %v764 = vld [vmem:[#allocation7 + $0x318] sm:$0xff]
    %v765 = vld [vmem:[#allocation7 + $0x320] sm:$0xff]
    %v766 = vld [vmem:[#allocation7 + $0x328] sm:$0xff]
    %v767 = vld [vmem:[#allocation7 + $0x330] sm:$0xff]
    %v768 = vld [vmem:[#allocation7 + $0x338] sm:$0xff]
    %v769 = vld [vmem:[#allocation7 + $0x340] sm:$0xff]
    %v770 = vld [vmem:[#allocation7 + $0x348] sm:$0xff]
    %v771 = vld [vmem:[#allocation7 + $0x350] sm:$0xff]
    %v772 = vld [vmem:[#allocation7 + $0x358] sm:$0xff]
    %v773 = vld [vmem:[#allocation7 + $0x360] sm:$0xff]
    %v774 = vld [vmem:[#allocation7 + $0x368] sm:$0xff]
    %v775 = vld [vmem:[#allocation7 + $0x370] sm:$0xff]
    %v776 = vld [vmem:[#allocation7 + $0x378] sm:$0xff]
    %v777 = vld [vmem:[#allocation7 + $0x380] sm:$0xff]
    %v778 = vld [vmem:[#allocation7 + $0x388] sm:$0xff]
    %v779 = vld [vmem:[#allocation7 + $0x390] sm:$0xff]
    %v780 = vld [vmem:[#allocation7 + $0x398] sm:$0xff]
    %v781 = vld [vmem:[#allocation7 + $0x3a0] sm:$0xff]
    %v782 = vld [vmem:[#allocation7 + $0x3a8] sm:$0xff]
    %v783 = vld [vmem:[#allocation7 + $0x3b0] sm:$0xff]
    %v784 = vld [vmem:[#allocation7 + $0x3b8] sm:$0xff]
    %v785 = vld [vmem:[#allocation7 + $0x3c0] sm:$0xff]
    %v786 = vld [vmem:[#allocation7 + $0x3c8] sm:$0xff]
    %v787 = vld [vmem:[#allocation7 + $0x3d0] sm:$0xff]
    %v788 = vld [vmem:[#allocation7 + $0x3d8] sm:$0xff]
    %v789 = vld [vmem:[#allocation7 + $0x3e0] sm:$0xff]
    %v790 = vld [vmem:[#allocation7 + $0x3e8] sm:$0xff]
    %v791 = vld [vmem:[#allocation7 + $0x3f0] sm:$0xff]
    %v792 = vld [vmem:[#allocation7 + $0x3f8] sm:$0xff]
    %v793 = vld [vmem:[%s4] sm:$0xf]
    %v795 = vlaneseq
    %v796 = vshrl.u32 %v795, 7
    %v797 = vsub.s32 0, %v796
    %v798 = vrot.slane %v793, %v797
    %v799 = vlaneseq
    %v800 = vshrl.u32 %v799, 7
    %v801 = vsub.s32 1, %v800
    %v802 = vrot.slane %v793, %v801
    %v803 = vlaneseq
    %v804 = vshrl.u32 %v803, 7
    %v805 = vsub.s32 2, %v804
    %v806 = vrot.slane %v793, %v805
    %v807 = vlaneseq
    %v808 = vshrl.u32 %v807, 7
    %v809 = vsub.s32 3, %v808
    %v810 = vrot.slane %v793, %v809
    %v943 = vunpack.c.l.b16 %v665
    %v944 = vunpack.c.h.b16 %v665
    %v945 = vunpack.c.l.b16 %v666
    %v946 = vunpack.c.h.b16 %v666
    %v947 = vunpack.c.l.b16 %v667
    %v948 = vunpack.c.h.b16 %v667
    %v949 = vunpack.c.l.b16 %v668
    %v950 = vunpack.c.h.b16 %v668
    %v951 = vunpack.c.l.b16 %v669
    %v952 = vunpack.c.h.b16 %v669
    %v953 = vunpack.c.l.b16 %v670
    %v954 = vunpack.c.h.b16 %v670
    %v955 = vunpack.c.l.b16 %v671
    %v956 = vunpack.c.h.b16 %v671
    %v957 = vunpack.c.l.b16 %v672
    %v958 = vunpack.c.h.b16 %v672
    %v959 = vunpack.c.l.b16 %v673
    %v960 = vunpack.c.h.b16 %v673
    %v961 = vunpack.c.l.b16 %v674
    %v962 = vunpack.c.h.b16 %v674
    %v963 = vunpack.c.l.b16 %v675
    %v964 = vunpack.c.h.b16 %v675
    %v965 = vunpack.c.l.b16 %v676
    %v966 = vunpack.c.h.b16 %v676
    %v967 = vunpack.c.l.b16 %v677
    %v968 = vunpack.c.h.b16 %v677
    %v969 = vunpack.c.l.b16 %v678
    %v970 = vunpack.c.h.b16 %v678
    %v971 = vunpack.c.l.b16 %v679
    %v972 = vunpack.c.h.b16 %v679
    %v973 = vunpack.c.l.b16 %v680
    %v974 = vunpack.c.h.b16 %v680
    %v975 = vunpack.c.l.b16 %v681
    %v976 = vunpack.c.h.b16 %v681
    %v977 = vunpack.c.l.b16 %v682
    %v978 = vunpack.c.h.b16 %v682
    %v979 = vunpack.c.l.b16 %v683
    %v980 = vunpack.c.h.b16 %v683
    %v981 = vunpack.c.l.b16 %v684
    %v982 = vunpack.c.h.b16 %v684
    %v983 = vunpack.c.l.b16 %v685
    %v984 = vunpack.c.h.b16 %v685
    %v985 = vunpack.c.l.b16 %v686
    %v986 = vunpack.c.h.b16 %v686
    %v987 = vunpack.c.l.b16 %v687
    %v988 = vunpack.c.h.b16 %v687
    %v989 = vunpack.c.l.b16 %v688
    %v990 = vunpack.c.h.b16 %v688
    %v991 = vunpack.c.l.b16 %v689
    %v992 = vunpack.c.h.b16 %v689
    %v993 = vunpack.c.l.b16 %v690
    %v994 = vunpack.c.h.b16 %v690
    %v995 = vunpack.c.l.b16 %v691
    %v996 = vunpack.c.h.b16 %v691
    %v997 = vunpack.c.l.b16 %v692
    %v998 = vunpack.c.h.b16 %v692
    %v999 = vunpack.c.l.b16 %v693
    %v1000 = vunpack.c.h.b16 %v693
    %v1001 = vunpack.c.l.b16 %v694
    %v1002 = vunpack.c.h.b16 %v694
    %v1003 = vunpack.c.l.b16 %v695
    %v1004 = vunpack.c.h.b16 %v695
    %v1005 = vunpack.c.l.b16 %v696
    %v1006 = vunpack.c.h.b16 %v696
    %v1007 = vunpack.c.l.b16 %v697
    %v1008 = vunpack.c.h.b16 %v697
    %v1009 = vunpack.c.l.b16 %v698
    %v1010 = vunpack.c.h.b16 %v698
    %v1011 = vunpack.c.l.b16 %v699
    %v1012 = vunpack.c.h.b16 %v699
    %v1013 = vunpack.c.l.b16 %v700
    %v1014 = vunpack.c.h.b16 %v700
    %v1015 = vunpack.c.l.b16 %v701
    %v1016 = vunpack.c.h.b16 %v701
    %v1017 = vunpack.c.l.b16 %v702
    %v1018 = vunpack.c.h.b16 %v702
    %v1019 = vunpack.c.l.b16 %v703
    %v1020 = vunpack.c.h.b16 %v703
    %v1021 = vunpack.c.l.b16 %v704
    %v1022 = vunpack.c.h.b16 %v704
    %v1023 = vunpack.c.l.b16 %v705
    %v1024 = vunpack.c.h.b16 %v705
    %v1025 = vunpack.c.l.b16 %v706
    %v1026 = vunpack.c.h.b16 %v706
    %v1027 = vunpack.c.l.b16 %v707
    %v1028 = vunpack.c.h.b16 %v707
    %v1029 = vunpack.c.l.b16 %v708
    %v1030 = vunpack.c.h.b16 %v708
    %v1031 = vunpack.c.l.b16 %v709
    %v1032 = vunpack.c.h.b16 %v709
    %v1033 = vunpack.c.l.b16 %v710
    %v1034 = vunpack.c.h.b16 %v710
    %v1035 = vunpack.c.l.b16 %v711
    %v1036 = vunpack.c.h.b16 %v711
    %v1037 = vunpack.c.l.b16 %v712
    %v1038 = vunpack.c.h.b16 %v712
    %v1039 = vunpack.c.l.b16 %v713
    %v1040 = vunpack.c.h.b16 %v713
    %v1041 = vunpack.c.l.b16 %v714
    %v1042 = vunpack.c.h.b16 %v714
    %v1043 = vunpack.c.l.b16 %v715
    %v1044 = vunpack.c.h.b16 %v715
    %v1045 = vunpack.c.l.b16 %v716
    %v1046 = vunpack.c.h.b16 %v716
    %v1047 = vunpack.c.l.b16 %v717
    %v1048 = vunpack.c.h.b16 %v717
    %v1049 = vunpack.c.l.b16 %v718
    %v1050 = vunpack.c.h.b16 %v718
    %v1051 = vunpack.c.l.b16 %v719
    %v1052 = vunpack.c.h.b16 %v719
    %v1053 = vunpack.c.l.b16 %v720
    %v1054 = vunpack.c.h.b16 %v720
    %v1055 = vunpack.c.l.b16 %v721
    %v1056 = vunpack.c.h.b16 %v721
    %v1057 = vunpack.c.l.b16 %v722
    %v1058 = vunpack.c.h.b16 %v722
    %v1059 = vunpack.c.l.b16 %v723
    %v1060 = vunpack.c.h.b16 %v723
    %v1061 = vunpack.c.l.b16 %v724
    %v1062 = vunpack.c.h.b16 %v724
    %v1063 = vunpack.c.l.b16 %v725
    %v1064 = vunpack.c.h.b16 %v725
    %v1065 = vunpack.c.l.b16 %v726
    %v1066 = vunpack.c.h.b16 %v726
    %v1067 = vunpack.c.l.b16 %v727
    %v1068 = vunpack.c.h.b16 %v727
    %v1069 = vunpack.c.l.b16 %v728
    %v1070 = vunpack.c.h.b16 %v728
    %v1071 = vunpack.c.l.b16 %v729
    %v1072 = vunpack.c.h.b16 %v729
    %v1073 = vunpack.c.l.b16 %v730
    %v1074 = vunpack.c.h.b16 %v730
    %v1075 = vunpack.c.l.b16 %v731
    %v1076 = vunpack.c.h.b16 %v731
    %v1077 = vunpack.c.l.b16 %v732
    %v1078 = vunpack.c.h.b16 %v732
    %v1079 = vunpack.c.l.b16 %v733
    %v1080 = vunpack.c.h.b16 %v733
    %v1081 = vunpack.c.l.b16 %v734
    %v1082 = vunpack.c.h.b16 %v734
    %v1083 = vunpack.c.l.b16 %v735
    %v1084 = vunpack.c.h.b16 %v735
    %v1085 = vunpack.c.l.b16 %v736
    %v1086 = vunpack.c.h.b16 %v736
    %v1087 = vunpack.c.l.b16 %v737
    %v1088 = vunpack.c.h.b16 %v737
    %v1089 = vunpack.c.l.b16 %v738
    %v1090 = vunpack.c.h.b16 %v738
    %v1091 = vunpack.c.l.b16 %v739
    %v1092 = vunpack.c.h.b16 %v739
    %v1093 = vunpack.c.l.b16 %v740
    %v1094 = vunpack.c.h.b16 %v740
    %v1095 = vunpack.c.l.b16 %v741
    %v1096 = vunpack.c.h.b16 %v741
    %v1097 = vunpack.c.l.b16 %v742
    %v1098 = vunpack.c.h.b16 %v742
    %v1099 = vunpack.c.l.b16 %v743
    %v1100 = vunpack.c.h.b16 %v743
    %v1101 = vunpack.c.l.b16 %v744
    %v1102 = vunpack.c.h.b16 %v744
    %v1103 = vunpack.c.l.b16 %v745
    %v1104 = vunpack.c.h.b16 %v745
    %v1105 = vunpack.c.l.b16 %v746
    %v1106 = vunpack.c.h.b16 %v746
    %v1107 = vunpack.c.l.b16 %v747
    %v1108 = vunpack.c.h.b16 %v747
    %v1109 = vunpack.c.l.b16 %v748
    %v1110 = vunpack.c.h.b16 %v748
    %v1111 = vunpack.c.l.b16 %v749
    %v1112 = vunpack.c.h.b16 %v749
    %v1113 = vunpack.c.l.b16 %v750
    %v1114 = vunpack.c.h.b16 %v750
    %v1115 = vunpack.c.l.b16 %v751
    %v1116 = vunpack.c.h.b16 %v751
    %v1117 = vunpack.c.l.b16 %v752
    %v1118 = vunpack.c.h.b16 %v752
    %v1119 = vunpack.c.l.b16 %v753
    %v1120 = vunpack.c.h.b16 %v753
    %v1121 = vunpack.c.l.b16 %v754
    %v1122 = vunpack.c.h.b16 %v754
    %v1123 = vunpack.c.l.b16 %v755
    %v1124 = vunpack.c.h.b16 %v755
    %v1125 = vunpack.c.l.b16 %v756
    %v1126 = vunpack.c.h.b16 %v756
    %v1127 = vunpack.c.l.b16 %v757
    %v1128 = vunpack.c.h.b16 %v757
    %v1129 = vunpack.c.l.b16 %v758
    %v1130 = vunpack.c.h.b16 %v758
    %v1131 = vunpack.c.l.b16 %v759
    %v1132 = vunpack.c.h.b16 %v759
    %v1133 = vunpack.c.l.b16 %v760
    %v1134 = vunpack.c.h.b16 %v760
    %v1135 = vunpack.c.l.b16 %v761
    %v1136 = vunpack.c.h.b16 %v761
    %v1137 = vunpack.c.l.b16 %v762
    %v1138 = vunpack.c.h.b16 %v762
    %v1139 = vunpack.c.l.b16 %v763
    %v1140 = vunpack.c.h.b16 %v763
    %v1141 = vunpack.c.l.b16 %v764
    %v1142 = vunpack.c.h.b16 %v764
    %v1143 = vunpack.c.l.b16 %v765
    %v1144 = vunpack.c.h.b16 %v765
    %v1145 = vunpack.c.l.b16 %v766
    %v1146 = vunpack.c.h.b16 %v766
    %v1147 = vunpack.c.l.b16 %v767
    %v1148 = vunpack.c.h.b16 %v767
    %v1149 = vunpack.c.l.b16 %v768
    %v1150 = vunpack.c.h.b16 %v768
    %v1151 = vunpack.c.l.b16 %v769
    %v1152 = vunpack.c.h.b16 %v769
    %v1153 = vunpack.c.l.b16 %v770
    %v1154 = vunpack.c.h.b16 %v770
    %v1155 = vunpack.c.l.b16 %v771
    %v1156 = vunpack.c.h.b16 %v771
    %v1157 = vunpack.c.l.b16 %v772
    %v1158 = vunpack.c.h.b16 %v772
    %v1159 = vunpack.c.l.b16 %v773
    %v1160 = vunpack.c.h.b16 %v773
    %v1161 = vunpack.c.l.b16 %v774
    %v1162 = vunpack.c.h.b16 %v774
    %v1163 = vunpack.c.l.b16 %v775
    %v1164 = vunpack.c.h.b16 %v775
    %v1165 = vunpack.c.l.b16 %v776
    %v1166 = vunpack.c.h.b16 %v776
    %v1167 = vunpack.c.l.b16 %v777
    %v1168 = vunpack.c.h.b16 %v777
    %v1169 = vunpack.c.l.b16 %v778
    %v1170 = vunpack.c.h.b16 %v778
    %v1171 = vunpack.c.l.b16 %v779
    %v1172 = vunpack.c.h.b16 %v779
    %v1173 = vunpack.c.l.b16 %v780
    %v1174 = vunpack.c.h.b16 %v780
    %v1175 = vunpack.c.l.b16 %v781
    %v1176 = vunpack.c.h.b16 %v781
    %v1177 = vunpack.c.l.b16 %v782
    %v1178 = vunpack.c.h.b16 %v782
    %v1179 = vunpack.c.l.b16 %v783
    %v1180 = vunpack.c.h.b16 %v783
    %v1181 = vunpack.c.l.b16 %v784
    %v1182 = vunpack.c.h.b16 %v784
    %v1183 = vunpack.c.l.b16 %v785
    %v1184 = vunpack.c.h.b16 %v785
    %v1185 = vunpack.c.l.b16 %v786
    %v1186 = vunpack.c.h.b16 %v786
    %v1187 = vunpack.c.l.b16 %v787
    %v1188 = vunpack.c.h.b16 %v787
    %v1189 = vunpack.c.l.b16 %v788
    %v1190 = vunpack.c.h.b16 %v788
    %v1191 = vunpack.c.l.b16 %v789
    %v1192 = vunpack.c.h.b16 %v789
    %v1193 = vunpack.c.l.b16 %v790
    %v1194 = vunpack.c.h.b16 %v790
    %v1195 = vunpack.c.l.b16 %v791
    %v1196 = vunpack.c.h.b16 %v791
    %v1197 = vunpack.c.l.b16 %v792
    %v1198 = vunpack.c.h.b16 %v792
    %v1199 = vpack.c.b16 %v947, %v943
    %v1200 = vpack.c.b16 %v948, %v944
    %v1201 = vpack.c.b16 %v949, %v945
    %v1202 = vpack.c.b16 %v950, %v946
    %v1203 = vpack.c.b16 %v955, %v951
    %v1204 = vpack.c.b16 %v956, %v952
    %v1205 = vpack.c.b16 %v957, %v953
    %v1206 = vpack.c.b16 %v958, %v954
    %v1207 = vpack.c.b16 %v963, %v959
    %v1208 = vpack.c.b16 %v964, %v960
    %v1209 = vpack.c.b16 %v965, %v961
    %v1210 = vpack.c.b16 %v966, %v962
    %v1211 = vpack.c.b16 %v971, %v967
    %v1212 = vpack.c.b16 %v972, %v968
    %v1213 = vpack.c.b16 %v973, %v969
    %v1214 = vpack.c.b16 %v974, %v970
    %v1215 = vpack.c.b16 %v979, %v975
    %v1216 = vpack.c.b16 %v980, %v976
    %v1217 = vpack.c.b16 %v981, %v977
    %v1218 = vpack.c.b16 %v982, %v978
    %v1219 = vpack.c.b16 %v987, %v983
    %v1220 = vpack.c.b16 %v988, %v984
    %v1221 = vpack.c.b16 %v989, %v985
    %v1222 = vpack.c.b16 %v990, %v986
    %v1223 = vpack.c.b16 %v995, %v991
    %v1224 = vpack.c.b16 %v996, %v992
    %v1225 = vpack.c.b16 %v997, %v993
    %v1226 = vpack.c.b16 %v998, %v994
    %v1227 = vpack.c.b16 %v1003, %v999
    %v1228 = vpack.c.b16 %v1004, %v1000
    %v1229 = vpack.c.b16 %v1005, %v1001
    %v1230 = vpack.c.b16 %v1006, %v1002
    %v1231 = vpack.c.b16 %v1011, %v1007
    %v1232 = vpack.c.b16 %v1012, %v1008
    %v1233 = vpack.c.b16 %v1013, %v1009
    %v1234 = vpack.c.b16 %v1014, %v1010
    %v1235 = vpack.c.b16 %v1019, %v1015
    %v1236 = vpack.c.b16 %v1020, %v1016
    %v1237 = vpack.c.b16 %v1021, %v1017
    %v1238 = vpack.c.b16 %v1022, %v1018
    %v1239 = vpack.c.b16 %v1027, %v1023
    %v1240 = vpack.c.b16 %v1028, %v1024
    %v1241 = vpack.c.b16 %v1029, %v1025
    %v1242 = vpack.c.b16 %v1030, %v1026
    %v1243 = vpack.c.b16 %v1035, %v1031
    %v1244 = vpack.c.b16 %v1036, %v1032
    %v1245 = vpack.c.b16 %v1037, %v1033
    %v1246 = vpack.c.b16 %v1038, %v1034
    %v1247 = vpack.c.b16 %v1043, %v1039
    %v1248 = vpack.c.b16 %v1044, %v1040
    %v1249 = vpack.c.b16 %v1045, %v1041
    %v1250 = vpack.c.b16 %v1046, %v1042
    %v1251 = vpack.c.b16 %v1051, %v1047
    %v1252 = vpack.c.b16 %v1052, %v1048
    %v1253 = vpack.c.b16 %v1053, %v1049
    %v1254 = vpack.c.b16 %v1054, %v1050
    %v1255 = vpack.c.b16 %v1059, %v1055
    %v1256 = vpack.c.b16 %v1060, %v1056
    %v1257 = vpack.c.b16 %v1061, %v1057
    %v1258 = vpack.c.b16 %v1062, %v1058
    %v1259 = vpack.c.b16 %v1067, %v1063
    %v1260 = vpack.c.b16 %v1068, %v1064
    %v1261 = vpack.c.b16 %v1069, %v1065
    %v1262 = vpack.c.b16 %v1070, %v1066
    %v1263 = vpack.c.b16 %v1075, %v1071
    %v1264 = vpack.c.b16 %v1076, %v1072
    %v1265 = vpack.c.b16 %v1077, %v1073
    %v1266 = vpack.c.b16 %v1078, %v1074
    %v1267 = vpack.c.b16 %v1083, %v1079
    %v1268 = vpack.c.b16 %v1084, %v1080
    %v1269 = vpack.c.b16 %v1085, %v1081
    %v1270 = vpack.c.b16 %v1086, %v1082
    %v1271 = vpack.c.b16 %v1091, %v1087
    %v1272 = vpack.c.b16 %v1092, %v1088
    %v1273 = vpack.c.b16 %v1093, %v1089
    %v1274 = vpack.c.b16 %v1094, %v1090
    %v1275 = vpack.c.b16 %v1099, %v1095
    %v1276 = vpack.c.b16 %v1100, %v1096
    %v1277 = vpack.c.b16 %v1101, %v1097
    %v1278 = vpack.c.b16 %v1102, %v1098
    %v1279 = vpack.c.b16 %v1107, %v1103
    %v1280 = vpack.c.b16 %v1108, %v1104
    %v1281 = vpack.c.b16 %v1109, %v1105
    %v1282 = vpack.c.b16 %v1110, %v1106
    %v1283 = vpack.c.b16 %v1115, %v1111
    %v1284 = vpack.c.b16 %v1116, %v1112
    %v1285 = vpack.c.b16 %v1117, %v1113
    %v1286 = vpack.c.b16 %v1118, %v1114
    %v1287 = vpack.c.b16 %v1123, %v1119
    %v1288 = vpack.c.b16 %v1124, %v1120
    %v1289 = vpack.c.b16 %v1125, %v1121
    %v1290 = vpack.c.b16 %v1126, %v1122
    %v1291 = vpack.c.b16 %v1131, %v1127
    %v1292 = vpack.c.b16 %v1132, %v1128
    %v1293 = vpack.c.b16 %v1133, %v1129
    %v1294 = vpack.c.b16 %v1134, %v1130
    %v1295 = vpack.c.b16 %v1139, %v1135
    %v1296 = vpack.c.b16 %v1140, %v1136
    %v1297 = vpack.c.b16 %v1141, %v1137
    %v1298 = vpack.c.b16 %v1142, %v1138
    %v1299 = vpack.c.b16 %v1147, %v1143
    %v1300 = vpack.c.b16 %v1148, %v1144
    %v1301 = vpack.c.b16 %v1149, %v1145
    %v1302 = vpack.c.b16 %v1150, %v1146
    %v1303 = vpack.c.b16 %v1155, %v1151
    %v1304 = vpack.c.b16 %v1156, %v1152
    %v1305 = vpack.c.b16 %v1157, %v1153
    %v1306 = vpack.c.b16 %v1158, %v1154
    %v1307 = vpack.c.b16 %v1163, %v1159
    %v1308 = vpack.c.b16 %v1164, %v1160
    %v1309 = vpack.c.b16 %v1165, %v1161
    %v1310 = vpack.c.b16 %v1166, %v1162
    %v1311 = vpack.c.b16 %v1171, %v1167
    %v1312 = vpack.c.b16 %v1172, %v1168
    %v1313 = vpack.c.b16 %v1173, %v1169
    %v1314 = vpack.c.b16 %v1174, %v1170
    %v1315 = vpack.c.b16 %v1179, %v1175
    %v1316 = vpack.c.b16 %v1180, %v1176
    %v1317 = vpack.c.b16 %v1181, %v1177
    %v1318 = vpack.c.b16 %v1182, %v1178
    %v1319 = vpack.c.b16 %v1187, %v1183
    %v1320 = vpack.c.b16 %v1188, %v1184
    %v1321 = vpack.c.b16 %v1189, %v1185
    %v1322 = vpack.c.b16 %v1190, %v1186
    %v1323 = vpack.c.b16 %v1195, %v1191
    %v1324 = vpack.c.b16 %v1196, %v1192
    %v1325 = vpack.c.b16 %v1197, %v1193
    %v1326 = vpack.c.b16 %v1198, %v1194
    %1455 = vmatprep.subr.bf16.mxu0 %v1200
    %1456 = vmatpush1.bf16.msra.mxu0 %v1199
    %1457 = vmatprep.subr.bf16.mxu0 %v1204
    %1458 = vmatpush1.bf16.msra.mxu0 %v1203
    %1459 = vmatprep.subr.bf16.mxu0 %v1208
    %1460 = vmatpush1.bf16.msra.mxu0 %v1207
    %1461 = vmatprep.subr.bf16.mxu0 %v1212
    %1462 = vmatpush1.bf16.msra.mxu0 %v1211
    %1463 = vmatprep.subr.bf16.mxu0 %v1216
    %1464 = vmatpush1.bf16.msra.mxu0 %v1215
    %1465 = vmatprep.subr.bf16.mxu0 %v1220
    %1466 = vmatpush1.bf16.msra.mxu0 %v1219
    %1467 = vmatprep.subr.bf16.mxu0 %v1224
    %1468 = vmatpush1.bf16.msra.mxu0 %v1223
    %1469 = vmatprep.subr.bf16.mxu0 %v1228
    %1470 = vmatpush1.bf16.msra.mxu0 %v1227
    %1471 = vmatprep.subr.bf16.mxu0 %v1232
    %1472 = vmatpush1.bf16.msra.mxu0 %v1231
    %1473 = vmatprep.subr.bf16.mxu0 %v1236
    %1474 = vmatpush1.bf16.msra.mxu0 %v1235
    %1475 = vmatprep.subr.bf16.mxu0 %v1240
    %1476 = vmatpush1.bf16.msra.mxu0 %v1239
    %1477 = vmatprep.subr.bf16.mxu0 %v1244
    %1478 = vmatpush1.bf16.msra.mxu0 %v1243
    %1479 = vmatprep.subr.bf16.mxu0 %v1248
    %1480 = vmatpush1.bf16.msra.mxu0 %v1247
    %1481 = vmatprep.subr.bf16.mxu0 %v1252
    %1482 = vmatpush1.bf16.msra.mxu0 %v1251
    %1483 = vmatprep.subr.bf16.mxu0 %v1256
    %1484 = vmatpush1.bf16.msra.mxu0 %v1255
    %1485 = vmatprep.subr.bf16.mxu0 %v1260
    %1486 = vmatpush1.bf16.msra.mxu0 %v1259
    %1487 = vmatprep.mubr.bf16.mxu0 %v662
    %1488 = vmatmul.mubr.bf16.gmra.mrb[0].mxu0 %v661
    %v1489 = vpop.f32.mrb[0].mxu0
    %v1490 = vadd.f32 %v798, %v1489
    %v1491 = vpop.f32.mrb[0].mxu0
    %v1492 = vadd.f32 %v802, %v1491
    %v1493 = vpop.f32.mrb[0].mxu0
    %v1494 = vpop.f32.mrb[0].mxu0
    %1495 = vdwg.mxu0
    %1496 = vmatprep.subr.bf16.mxu0 %v1264
    %1497 = vmatpush1.bf16.msra.mxu0 %v1263
    %1498 = vmatprep.subr.bf16.mxu0 %v1268
    %1499 = vmatpush1.bf16.msra.mxu0 %v1267
    %1500 = vmatprep.subr.bf16.mxu0 %v1272
    %1501 = vmatpush1.bf16.msra.mxu0 %v1271
    %1502 = vmatprep.subr.bf16.mxu0 %v1276
    %1503 = vmatpush1.bf16.msra.mxu0 %v1275
    %1504 = vmatprep.subr.bf16.mxu0 %v1280
    %1505 = vmatpush1.bf16.msra.mxu0 %v1279
    %1506 = vmatprep.subr.bf16.mxu0 %v1284
    %1507 = vmatpush1.bf16.msra.mxu0 %v1283
    %1508 = vmatprep.subr.bf16.mxu0 %v1288
    %1509 = vmatpush1.bf16.msra.mxu0 %v1287
    %1510 = vmatprep.subr.bf16.mxu0 %v1292
    %1511 = vmatpush1.bf16.msra.mxu0 %v1291
    %1512 = vmatprep.subr.bf16.mxu0 %v1296
    %1513 = vmatpush1.bf16.msra.mxu0 %v1295
    %1514 = vmatprep.subr.bf16.mxu0 %v1300
    %1515 = vmatpush1.bf16.msra.mxu0 %v1299
    %1516 = vmatprep.subr.bf16.mxu0 %v1304
    %1517 = vmatpush1.bf16.msra.mxu0 %v1303
    %1518 = vmatprep.subr.bf16.mxu0 %v1308
    %1519 = vmatpush1.bf16.msra.mxu0 %v1307
    %1520 = vmatprep.subr.bf16.mxu0 %v1312
    %1521 = vmatpush1.bf16.msra.mxu0 %v1311
    %1522 = vmatprep.subr.bf16.mxu0 %v1316
    %1523 = vmatpush1.bf16.msra.mxu0 %v1315
    %1524 = vmatprep.subr.bf16.mxu0 %v1320
    %1525 = vmatpush1.bf16.msra.mxu0 %v1319
    %1526 = vmatprep.subr.bf16.mxu0 %v1324
    %1527 = vmatpush1.bf16.msra.mxu0 %v1323
    %1528 = vmatprep.mubr.bf16.mxu0 %v664
    %1529 = vmatmul.mubr.bf16.gmra.mrb[0].mxu0 %v663
    %v1530 = vpop.f32.mrb[0].mxu0
    %v1531 = vadd.f32 %v1490, %v1530
    %v1532 = vpop.f32.mrb[0].mxu0
    %v1533 = vadd.f32 %v1492, %v1532
    %v1534 = vpop.f32.mrb[0].mxu0
    %v1535 = vpop.f32.mrb[0].mxu0
    %1536 = vdwg.mxu0
    %1537 = vmatprep.subr.bf16.mxu0 %v1202
    %1538 = vmatpush1.bf16.msra.mxu0 %v1201
    %1539 = vmatprep.subr.bf16.mxu0 %v1206
    %1540 = vmatpush1.bf16.msra.mxu0 %v1205
    %1541 = vmatprep.subr.bf16.mxu0 %v1210
    %1542 = vmatpush1.bf16.msra.mxu0 %v1209
    %1543 = vmatprep.subr.bf16.mxu0 %v1214
    %1544 = vmatpush1.bf16.msra.mxu0 %v1213
    %1545 = vmatprep.subr.bf16.mxu0 %v1218
    %1546 = vmatpush1.bf16.msra.mxu0 %v1217
    %1547 = vmatprep.subr.bf16.mxu0 %v1222
    %1548 = vmatpush1.bf16.msra.mxu0 %v1221
    %1549 = vmatprep.subr.bf16.mxu0 %v1226
    %1550 = vmatpush1.bf16.msra.mxu0 %v1225
    %1551 = vmatprep.subr.bf16.mxu0 %v1230
    %1552 = vmatpush1.bf16.msra.mxu0 %v1229
    %1553 = vmatprep.subr.bf16.mxu0 %v1234
    %1554 = vmatpush1.bf16.msra.mxu0 %v1233
    %1555 = vmatprep.subr.bf16.mxu0 %v1238
    %1556 = vmatpush1.bf16.msra.mxu0 %v1237
    %1557 = vmatprep.subr.bf16.mxu0 %v1242
    %1558 = vmatpush1.bf16.msra.mxu0 %v1241
    %1559 = vmatprep.subr.bf16.mxu0 %v1246
    %1560 = vmatpush1.bf16.msra.mxu0 %v1245
    %1561 = vmatprep.subr.bf16.mxu0 %v1250
    %1562 = vmatpush1.bf16.msra.mxu0 %v1249
    %1563 = vmatprep.subr.bf16.mxu0 %v1254
    %1564 = vmatpush1.bf16.msra.mxu0 %v1253
    %1565 = vmatprep.subr.bf16.mxu0 %v1258
    %1566 = vmatpush1.bf16.msra.mxu0 %v1257
    %1567 = vmatprep.subr.bf16.mxu0 %v1262
    %1568 = vmatpush1.bf16.msra.mxu0 %v1261
    %1569 = vmatprep.mubr.bf16.mxu0 %v662
    %1570 = vmatmul.mubr.bf16.gmra.mrb[0].mxu0 %v661
    %v1571 = vpop.f32.mrb[0].mxu0
    %v1572 = vadd.f32 %v806, %v1571
    %v1573 = vpop.f32.mrb[0].mxu0
    %v1574 = vadd.f32 %v810, %v1573
    %v1575 = vpop.f32.mrb[0].mxu0
    %v1576 = vpop.f32.mrb[0].mxu0
    %1577 = vdwg.mxu0
    %1578 = vmatprep.subr.bf16.mxu0 %v1266
    %1579 = vmatpush1.bf16.msra.mxu0 %v1265
    %1580 = vmatprep.subr.bf16.mxu0 %v1270
    %1581 = vmatpush1.bf16.msra.mxu0 %v1269
    %1582 = vmatprep.subr.bf16.mxu0 %v1274
    %1583 = vmatpush1.bf16.msra.mxu0 %v1273
    %1584 = vmatprep.subr.bf16.mxu0 %v1278
    %1585 = vmatpush1.bf16.msra.mxu0 %v1277
    %1586 = vmatprep.subr.bf16.mxu0 %v1282
    %1587 = vmatpush1.bf16.msra.mxu0 %v1281
    %1588 = vmatprep.subr.bf16.mxu0 %v1286
    %1589 = vmatpush1.bf16.msra.mxu0 %v1285
    %1590 = vmatprep.subr.bf16.mxu0 %v1290
    %1591 = vmatpush1.bf16.msra.mxu0 %v1289
    %1592 = vmatprep.subr.bf16.mxu0 %v1294
    %1593 = vmatpush1.bf16.msra.mxu0 %v1293
    %1594 = vmatprep.subr.bf16.mxu0 %v1298
    %1595 = vmatpush1.bf16.msra.mxu0 %v1297
    %1596 = vmatprep.subr.bf16.mxu0 %v1302
    %1597 = vmatpush1.bf16.msra.mxu0 %v1301
    %1598 = vmatprep.subr.bf16.mxu0 %v1306
    %1599 = vmatpush1.bf16.msra.mxu0 %v1305
    %1600 = vmatprep.subr.bf16.mxu0 %v1310
    %1601 = vmatpush1.bf16.msra.mxu0 %v1309
    %1602 = vmatprep.subr.bf16.mxu0 %v1314
    %1603 = vmatpush1.bf16.msra.mxu0 %v1313
    %1604 = vmatprep.subr.bf16.mxu0 %v1318
    %1605 = vmatpush1.bf16.msra.mxu0 %v1317
    %1606 = vmatprep.subr.bf16.mxu0 %v1322
    %1607 = vmatpush1.bf16.msra.mxu0 %v1321
    %1608 = vmatprep.subr.bf16.mxu0 %v1326
    %1609 = vmatpush1.bf16.msra.mxu0 %v1325
    %1610 = vmatprep.mubr.bf16.mxu0 %v664
    %1611 = vmatmul.mubr.bf16.gmra.mrb[0].mxu0 %v663
    %v1612 = vpop.f32.mrb[0].mxu0
    %v1613 = vadd.f32 %v1572, %v1612
    %v1614 = vpop.f32.mrb[0].mxu0
    %v1615 = vadd.f32 %v1574, %v1614
    %v1616 = vpop.f32.mrb[0].mxu0
    %v1617 = vpop.f32.mrb[0].mxu0
    %1618 = vdwg.mxu0
    %v1619 = vmax.f32 %v1531, 0.0
    %v1620 = vmax.f32 %v1533, 0.0
    %v1621 = vmax.f32 %v1613, 0.0
    %v1622 = vmax.f32 %v1615, 0.0
    %v1623 = vpack.c.bf16 %v1619, %v1619
    %v1624 = vpack.c.bf16 %v1620, %v1620
    %v1625 = vpack.c.bf16 %v1621, %v1621
    %v1626 = vpack.c.bf16 %v1622, %v1622
    %v1627 = vld [vmem:[#allocation8] sm:$0xf]
    %v1628 = vld [vmem:[#allocation8 + $0x4] sm:$0xf]
    %v1629 = vld [vmem:[#allocation8 + $0x8] sm:$0xf]
    %v1630 = vld [vmem:[#allocation8 + $0xc] sm:$0xf]
    %v1631 = vld [vmem:[#allocation8 + $0x10] sm:$0xf]
    %v1632 = vld [vmem:[#allocation8 + $0x14] sm:$0xf]
    %v1633 = vld [vmem:[#allocation8 + $0x18] sm:$0xf]
    %v1634 = vld [vmem:[#allocation8 + $0x1c] sm:$0xf]
    %v1635 = vld [vmem:[#allocation8 + $0x20] sm:$0xf]
    %v1636 = vld [vmem:[#allocation8 + $0x24] sm:$0xf]
    %v1637 = vld [vmem:[#allocation8 + $0x28] sm:$0xf]
    %v1638 = vld [vmem:[#allocation8 + $0x2c] sm:$0xf]
    %v1639 = vld [vmem:[#allocation8 + $0x30] sm:$0xf]
    %v1640 = vld [vmem:[#allocation8 + $0x34] sm:$0xf]
    %v1641 = vld [vmem:[#allocation8 + $0x38] sm:$0xf]
    %v1642 = vld [vmem:[#allocation8 + $0x3c] sm:$0xf]
    %v1643 = vld [vmem:[#allocation8 + $0x40] sm:$0xf]
    %v1644 = vld [vmem:[#allocation8 + $0x44] sm:$0xf]
    %v1645 = vld [vmem:[#allocation8 + $0x48] sm:$0xf]
    %v1646 = vld [vmem:[#allocation8 + $0x4c] sm:$0xf]
    %v1647 = vld [vmem:[#allocation8 + $0x50] sm:$0xf]
    %v1648 = vld [vmem:[#allocation8 + $0x54] sm:$0xf]
    %v1649 = vld [vmem:[#allocation8 + $0x58] sm:$0xf]
    %v1650 = vld [vmem:[#allocation8 + $0x5c] sm:$0xf]
    %v1651 = vld [vmem:[#allocation8 + $0x60] sm:$0xf]
    %v1652 = vld [vmem:[#allocation8 + $0x64] sm:$0xf]
    %v1653 = vld [vmem:[#allocation8 + $0x68] sm:$0xf]
    %v1654 = vld [vmem:[#allocation8 + $0x6c] sm:$0xf]
    %v1655 = vld [vmem:[#allocation8 + $0x70] sm:$0xf]
    %v1656 = vld [vmem:[#allocation8 + $0x74] sm:$0xf]
    %v1657 = vld [vmem:[#allocation8 + $0x78] sm:$0xf]
    %v1658 = vld [vmem:[#allocation8 + $0x7c] sm:$0xf]
    %v1659 = vld [vmem:[#allocation8 + $0x80] sm:$0xf]
    %v1660 = vld [vmem:[#allocation8 + $0x84] sm:$0xf]
    %v1661 = vld [vmem:[#allocation8 + $0x88] sm:$0xf]
    %v1662 = vld [vmem:[#allocation8 + $0x8c] sm:$0xf]
    %v1663 = vld [vmem:[#allocation8 + $0x90] sm:$0xf]
    %v1664 = vld [vmem:[#allocation8 + $0x94] sm:$0xf]
    %v1665 = vld [vmem:[#allocation8 + $0x98] sm:$0xf]
    %v1666 = vld [vmem:[#allocation8 + $0x9c] sm:$0xf]
    %v1667 = vld [vmem:[#allocation8 + $0xa0] sm:$0xf]
    %v1668 = vld [vmem:[#allocation8 + $0xa4] sm:$0xf]
    %v1669 = vld [vmem:[#allocation8 + $0xa8] sm:$0xf]
    %v1670 = vld [vmem:[#allocation8 + $0xac] sm:$0xf]
    %v1671 = vld [vmem:[#allocation8 + $0xb0] sm:$0xf]
    %v1672 = vld [vmem:[#allocation8 + $0xb4] sm:$0xf]
    %v1673 = vld [vmem:[#allocation8 + $0xb8] sm:$0xf]
    %v1674 = vld [vmem:[#allocation8 + $0xbc] sm:$0xf]
    %v1675 = vld [vmem:[#allocation8 + $0xc0] sm:$0xf]
    %v1676 = vld [vmem:[#allocation8 + $0xc4] sm:$0xf]
    %v1677 = vld [vmem:[#allocation8 + $0xc8] sm:$0xf]
    %v1678 = vld [vmem:[#allocation8 + $0xcc] sm:$0xf]
    %v1679 = vld [vmem:[#allocation8 + $0xd0] sm:$0xf]
    %v1680 = vld [vmem:[#allocation8 + $0xd4] sm:$0xf]
    %v1681 = vld [vmem:[#allocation8 + $0xd8] sm:$0xf]
    %v1682 = vld [vmem:[#allocation8 + $0xdc] sm:$0xf]
    %v1683 = vld [vmem:[#allocation8 + $0xe0] sm:$0xf]
    %v1684 = vld [vmem:[#allocation8 + $0xe4] sm:$0xf]
    %v1685 = vld [vmem:[#allocation8 + $0xe8] sm:$0xf]
    %v1686 = vld [vmem:[#allocation8 + $0xec] sm:$0xf]
    %v1687 = vld [vmem:[#allocation8 + $0xf0] sm:$0xf]
    %v1688 = vld [vmem:[#allocation8 + $0xf4] sm:$0xf]
    %v1689 = vld [vmem:[#allocation8 + $0xf8] sm:$0xf]
    %v1690 = vld [vmem:[#allocation8 + $0xfc] sm:$0xf]
    %v1691 = vld [vmem:[%s6] sm:$0x1]
    %v1692 = vlaneseq
    %v1693 = vshrl.u32 %v1692, 7
    %v1694 = vsub.s32 0, %v1693
    %v1695 = vrot.slane %v1691, %v1694
    %v1760 = vunpack.c.l.b16 %v1627
    %v1761 = vunpack.c.l.b16 %v1628
    %v1762 = vunpack.c.l.b16 %v1629
    %v1763 = vunpack.c.l.b16 %v1630
    %v1764 = vunpack.c.l.b16 %v1631
    %v1765 = vunpack.c.l.b16 %v1632
    %v1766 = vunpack.c.l.b16 %v1633
    %v1767 = vunpack.c.l.b16 %v1634
    %v1768 = vunpack.c.l.b16 %v1635
    %v1769 = vunpack.c.l.b16 %v1636
    %v1770 = vunpack.c.l.b16 %v1637
    %v1771 = vunpack.c.l.b16 %v1638
    %v1772 = vunpack.c.l.b16 %v1639
    %v1773 = vunpack.c.l.b16 %v1640
    %v1774 = vunpack.c.l.b16 %v1641
    %v1775 = vunpack.c.l.b16 %v1642
    %v1776 = vunpack.c.l.b16 %v1643
    %v1777 = vunpack.c.l.b16 %v1644
    %v1778 = vunpack.c.l.b16 %v1645
    %v1779 = vunpack.c.l.b16 %v1646
    %v1780 = vunpack.c.l.b16 %v1647
    %v1781 = vunpack.c.l.b16 %v1648
    %v1782 = vunpack.c.l.b16 %v1649
    %v1783 = vunpack.c.l.b16 %v1650
    %v1784 = vunpack.c.l.b16 %v1651
    %v1785 = vunpack.c.l.b16 %v1652
    %v1786 = vunpack.c.l.b16 %v1653
    %v1787 = vunpack.c.l.b16 %v1654
    %v1788 = vunpack.c.l.b16 %v1655
    %v1789 = vunpack.c.l.b16 %v1656
    %v1790 = vunpack.c.l.b16 %v1657
    %v1791 = vunpack.c.l.b16 %v1658
    %v1792 = vunpack.c.l.b16 %v1659
    %v1793 = vunpack.c.l.b16 %v1660
    %v1794 = vunpack.c.l.b16 %v1661
    %v1795 = vunpack.c.l.b16 %v1662
    %v1796 = vunpack.c.l.b16 %v1663
    %v1797 = vunpack.c.l.b16 %v1664
    %v1798 = vunpack.c.l.b16 %v1665
    %v1799 = vunpack.c.l.b16 %v1666
    %v1800 = vunpack.c.l.b16 %v1667
    %v1801 = vunpack.c.l.b16 %v1668
    %v1802 = vunpack.c.l.b16 %v1669
    %v1803 = vunpack.c.l.b16 %v1670
    %v1804 = vunpack.c.l.b16 %v1671
    %v1805 = vunpack.c.l.b16 %v1672
    %v1806 = vunpack.c.l.b16 %v1673
    %v1807 = vunpack.c.l.b16 %v1674
    %v1808 = vunpack.c.l.b16 %v1675
    %v1809 = vunpack.c.l.b16 %v1676
    %v1810 = vunpack.c.l.b16 %v1677
    %v1811 = vunpack.c.l.b16 %v1678
    %v1812 = vunpack.c.l.b16 %v1679
    %v1813 = vunpack.c.l.b16 %v1680
    %v1814 = vunpack.c.l.b16 %v1681
    %v1815 = vunpack.c.l.b16 %v1682
    %v1816 = vunpack.c.l.b16 %v1683
    %v1817 = vunpack.c.l.b16 %v1684
    %v1818 = vunpack.c.l.b16 %v1685
    %v1819 = vunpack.c.l.b16 %v1686
    %v1820 = vunpack.c.l.b16 %v1687
    %v1821 = vunpack.c.l.b16 %v1688
    %v1822 = vunpack.c.l.b16 %v1689
    %v1823 = vunpack.c.l.b16 %v1690
    %v1824 = vpack.c.b16 %v1761, %v1760
    %v1825 = vpack.c.b16 %v1763, %v1762
    %v1826 = vpack.c.b16 %v1765, %v1764
    %v1827 = vpack.c.b16 %v1767, %v1766
    %v1828 = vpack.c.b16 %v1769, %v1768
    %v1829 = vpack.c.b16 %v1771, %v1770
    %v1830 = vpack.c.b16 %v1773, %v1772
    %v1831 = vpack.c.b16 %v1775, %v1774
    %v1832 = vpack.c.b16 %v1777, %v1776
    %v1833 = vpack.c.b16 %v1779, %v1778
    %v1834 = vpack.c.b16 %v1781, %v1780
    %v1835 = vpack.c.b16 %v1783, %v1782
    %v1836 = vpack.c.b16 %v1785, %v1784
    %v1837 = vpack.c.b16 %v1787, %v1786
    %v1838 = vpack.c.b16 %v1789, %v1788
    %v1839 = vpack.c.b16 %v1791, %v1790
    %v1840 = vpack.c.b16 %v1793, %v1792
    %v1841 = vpack.c.b16 %v1795, %v1794
    %v1842 = vpack.c.b16 %v1797, %v1796
    %v1843 = vpack.c.b16 %v1799, %v1798
    %v1844 = vpack.c.b16 %v1801, %v1800
    %v1845 = vpack.c.b16 %v1803, %v1802
    %v1846 = vpack.c.b16 %v1805, %v1804
    %v1847 = vpack.c.b16 %v1807, %v1806
    %v1848 = vpack.c.b16 %v1809, %v1808
    %v1849 = vpack.c.b16 %v1811, %v1810
    %v1850 = vpack.c.b16 %v1813, %v1812
    %v1851 = vpack.c.b16 %v1815, %v1814
    %v1852 = vpack.c.b16 %v1817, %v1816
    %v1853 = vpack.c.b16 %v1819, %v1818
    %v1854 = vpack.c.b16 %v1821, %v1820
    %v1855 = vpack.c.b16 %v1823, %v1822
    %1888 = vmatprep.subr.bf16.mxu0 0
    %1889 = vmatpush1.bf16.msra.mxu0 %v1824
    %1890 = vmatprep.subr.bf16.mxu0 0
    %1891 = vmatpush1.bf16.msra.mxu0 %v1825
    %1892 = vmatprep.subr.bf16.mxu0 0
    %1893 = vmatpush1.bf16.msra.mxu0 %v1826
    %1894 = vmatprep.subr.bf16.mxu0 0
    %1895 = vmatpush1.bf16.msra.mxu0 %v1827
    %1896 = vmatprep.subr.bf16.mxu0 0
    %1897 = vmatpush1.bf16.msra.mxu0 %v1828
    %1898 = vmatprep.subr.bf16.mxu0 0
    %1899 = vmatpush1.bf16.msra.mxu0 %v1829
    %1900 = vmatprep.subr.bf16.mxu0 0
    %1901 = vmatpush1.bf16.msra.mxu0 %v1830
    %1902 = vmatprep.subr.bf16.mxu0 0
    %1903 = vmatpush1.bf16.msra.mxu0 %v1831
    %1904 = vmatprep.subr.bf16.mxu0 0
    %1905 = vmatpush1.bf16.msra.mxu0 %v1832
    %1906 = vmatprep.subr.bf16.mxu0 0
    %1907 = vmatpush1.bf16.msra.mxu0 %v1833
    %1908 = vmatprep.subr.bf16.mxu0 0
    %1909 = vmatpush1.bf16.msra.mxu0 %v1834
    %1910 = vmatprep.subr.bf16.mxu0 0
    %1911 = vmatpush1.bf16.msra.mxu0 %v1835
    %1912 = vmatprep.subr.bf16.mxu0 0
    %1913 = vmatpush1.bf16.msra.mxu0 %v1836
    %1914 = vmatprep.subr.bf16.mxu0 0
    %1915 = vmatpush1.bf16.msra.mxu0 %v1837
    %1916 = vmatprep.subr.bf16.mxu0 0
    %1917 = vmatpush1.bf16.msra.mxu0 %v1838
    %1918 = vmatprep.subr.bf16.mxu0 0
    %1919 = vmatpush1.bf16.msra.mxu0 %v1839
    %1920 = vmatprep.mubr.bf16.mxu0 %v1624
    %1921 = vmatmul.mubr.bf16.gmra.mrb[0].mxu0 %v1623
    %v1922 = vpop.f32.mrb[0].mxu0
    %v1923 = vadd.f32 %v1695, %v1922
    %v1924 = vpop.f32.mrb[0].mxu0
    %v1925 = vpop.f32.mrb[0].mxu0
    %v1926 = vpop.f32.mrb[0].mxu0
    %1927 = vdwg.mxu0
    %1928 = vmatprep.subr.bf16.mxu0 0
    %1929 = vmatpush1.bf16.msra.mxu0 %v1840
    %1930 = vmatprep.subr.bf16.mxu0 0
    %1931 = vmatpush1.bf16.msra.mxu0 %v1841
    %1932 = vmatprep.subr.bf16.mxu0 0
    %1933 = vmatpush1.bf16.msra.mxu0 %v1842
    %1934 = vmatprep.subr.bf16.mxu0 0
    %1935 = vmatpush1.bf16.msra.mxu0 %v1843
    %1936 = vmatprep.subr.bf16.mxu0 0
    %1937 = vmatpush1.bf16.msra.mxu0 %v1844
    %1938 = vmatprep.subr.bf16.mxu0 0
    %1939 = vmatpush1.bf16.msra.mxu0 %v1845
    %1940 = vmatprep.subr.bf16.mxu0 0
    %1941 = vmatpush1.bf16.msra.mxu0 %v1846
    %1942 = vmatprep.subr.bf16.mxu0 0
    %1943 = vmatpush1.bf16.msra.mxu0 %v1847
    %1944 = vmatprep.subr.bf16.mxu0 0
    %1945 = vmatpush1.bf16.msra.mxu0 %v1848
    %1946 = vmatprep.subr.bf16.mxu0 0
    %1947 = vmatpush1.bf16.msra.mxu0 %v1849
    %1948 = vmatprep.subr.bf16.mxu0 0
    %1949 = vmatpush1.bf16.msra.mxu0 %v1850
    %1950 = vmatprep.subr.bf16.mxu0 0
    %1951 = vmatpush1.bf16.msra.mxu0 %v1851
    %1952 = vmatprep.subr.bf16.mxu0 0
    %1953 = vmatpush1.bf16.msra.mxu0 %v1852
    %1954 = vmatprep.subr.bf16.mxu0 0
    %1955 = vmatpush1.bf16.msra.mxu0 %v1853
    %1956 = vmatprep.subr.bf16.mxu0 0
    %1957 = vmatpush1.bf16.msra.mxu0 %v1854
    %1958 = vmatprep.subr.bf16.mxu0 0
    %1959 = vmatpush1.bf16.msra.mxu0 %v1855
    %1960 = vmatprep.mubr.bf16.mxu0 %v1626
    %1961 = vmatmul.mubr.bf16.gmra.mrb[0].mxu0 %v1625
    %v1962 = vpop.f32.mrb[0].mxu0
    %v1963 = vadd.f32 %v1923, %v1962
    %v1964 = vpop.f32.mrb[0].mxu0
    %v1965 = vpop.f32.mrb[0].mxu0
    %v1966 = vpop.f32.mrb[0].mxu0
    %1967 = vdwg.mxu0
    %v1968 = vld [vmem:[%s6 + $0x1] sm:$0x1]
    %v1969 = vtanh.pop %v1963
    %v1970 = vlaneseq
    %v1971 = vshrl.u32 %v1970, 7
    %v1972 = vsub.s32 0, %v1971
    %v1973 = vrot.slane %v1968, %v1972
    %v1974 = vmul.f32 %v1973, %v1969
    %1975 = vst [vmem:[#allocation10] sm:$0xff] %v1974
    // Predicated region
    $region46: #{tpu_custom_call.1} parent=1 // pred_check
      _
    $region47: #{tpu_custom_call.1} parent=1 // pred_check_branch
      %1977 = sbr.rel (0) target = $region49
    $region48: #{tpu_custom_call.1} parent=1 // pred_region
      %s1979 = ssub.s32 128, 16
      %1980 = vsyncadd [#allocation4], %s1979
      %s1981 = sshll.u32 [#allocation10], 4
      %s1982 = int_to_ptr.vmem [resolvable:$true] %s1981
      %1987 = dma.vmem_to_hbm [thread:$0]  %s1982, 16, %s7, [#allocation4], 16, 16, 1
    $region49: #{tpu_custom_call.1} parent=1 // pred_fallthru
      _
    // Predicated region
    $region50: #{tpu_custom_call.1} parent=1 // pred_check
      _
    $region51: #{tpu_custom_call.1} parent=1 // pred_check_branch
      %1989 = sbr.rel (0) target = $region53
    $region52: #{tpu_custom_call.1} parent=1 // pred_region
      %1990 = dma.done [#allocation4], 128
    $region53: #{tpu_custom_call.1} parent=1 // pred_fallthru
      _
    %1991 = vsyncpa [#allocation3], 1
    %1992 = vsyncpa [#allocation6], 1
    %1993 = vsyncpa [#allocation9], 1
    %1994 = vsyncpa [#allocation4], 1

</llo_original>
